<compile_context>
chip_gen: v7x
topology: tpu7x:2x2x1
jax: 0.10.0
libtpu: 0.0.40
codegen_flags: <defaults>
</compile_context>

<pallas_src>
import functools

import jax
import jax.numpy as jnp
from jax.experimental import pallas as pl
from jax.experimental.pallas import tpu as pltpu

KH = KW = 3  # 3x3 conv, stride 1, padding 1


def _round_up(x, m):
    return (x + m - 1) // m * m


def _pick_batch_tile(n_pad, max_tile=64):
    """Batch tile: multiple of 8, as large as VMEM comfortably allows, and
    preferring >=2 grid steps (v7x megacore) when the batch is big enough."""
    t = min(max_tile, n_pad)
    if t == n_pad and n_pad >= 16:
        t = n_pad // 2
    t = max(8, (t // 8) * 8)
    while n_pad % t:
        t -= 8
    return t


def fused_kernel(x_ref, bconv_ref, bias_c_ref, wf_ref, bias_f_ref, o_ref,
                 patches_ref, *, H, W, Cin, Call):
    """Conv (all parallel blocks) + bias + ReLU + fused FC epilogue.

    x_ref      : (H, NB, W*Cin)          input tile, kh shifts on leading dim
    bconv_ref  : (KH*W*Cin, W*Call)      banded conv RHS (kw taps folded in)
    bias_c_ref : (1, W*Call)             conv bias tiled over w
    wf_ref     : (H*W*Call, Fp)          fc weight rows in (h, w, blk, c) order
    bias_f_ref : (1, Fp)                 fc bias (lane-padded)
    o_ref      : (NB, Fp)                lane-dense output tile
    patches_ref: (H, NB, KH*W*Cin)       VMEM patch scratch
    """
    NB = x_ref.shape[1]
    KWCIN = W * Cin                      # 64
    WCall = W * Call                     # 256
    Fp = o_ref.shape[1]

    # ---- lane-dense patch build: 3 aligned slab copies (one per kh tap) ----
    # patches[(h, nb), kh*W*Cin + w*Cin + ci] = x[nb, ci, h+kh-1, w] (0 outside)
    # Only the two halo rows are zeroed, every step (cheap; megacore-safe).
    patches_ref[0:1, :, 0:KWCIN] = jnp.zeros((1, NB, KWCIN), jnp.float32)
    patches_ref[H - 1:H, :, 2 * KWCIN:3 * KWCIN] = jnp.zeros(
        (1, NB, KWCIN), jnp.float32)
    patches_ref[1:H, :, 0:KWCIN] = x_ref[0:H - 1, :, :]            # kh = 0
    patches_ref[:, :, KWCIN:2 * KWCIN] = x_ref[...]                # kh = 1
    patches_ref[0:H - 1, :, 2 * KWCIN:3 * KWCIN] = x_ref[1:H, :, :]  # kh = 2

    # ---- all parallel conv blocks in ONE MXU matmul, bias + ReLU -----------
    # (H, NB) -> H*NB fold is layout-preserving (NB is a multiple of 8).
    patches = patches_ref[...].reshape(H * NB, KH * KWCIN)
    conv = jnp.dot(patches, bconv_ref[...],
                   preferred_element_type=jnp.float32)
    act = jnp.maximum(conv + bias_c_ref[...], 0.0)       # (H*NB, W*Call)

    # ---- fused FC epilogue: accumulate over h with aligned row slices ------
    # Avoids the rows->lanes flatten relayout entirely; wf rows were permuted
    # at trace time to (h, w, blk, c) so this equals fc(cat(flatten(blocks))).
    acc = jnp.zeros((NB, Fp), jnp.float32)
    for h in range(H):
        acc = acc + jnp.dot(act[h * NB:(h + 1) * NB, :],
                            wf_ref[h * WCall:(h + 1) * WCall, :],
                            preferred_element_type=jnp.float32)
    o_ref[...] = acc + bias_f_ref[...]


def cnn_parallel_forward(x_nchw, conv_ws_oihw, conv_bs, fc_w_torch, fc_b,
                         *, n_tile=None):
    """Pallas forward of cnn_parallel.

    conv_ws_oihw: list of (Cout, Cin, KH, KW)   (torch Conv2d weight layout)
    conv_bs     : list of (Cout,)
    fc_w_torch  : (F, num_blocks*Cout*H*W)      (torch Linear weight layout)
    fc_b        : (F,)
    """
    N, Cin, H, W = x_nchw.shape
    num_blocks = len(conv_ws_oihw)
    Cout = conv_ws_oihw[0].shape[0]
    F = fc_w_torch.shape[0]
    Call = num_blocks * Cout
    WCall = W * Call
    Fp = _round_up(F, 128)               # lane-dense FC weight & output

    # ---- trace-time weight plumbing (tiny, one-off; layout not compute) ----
    # (1) All blocks' conv weights -> one banded (KH*W*Cin, W*Call) RHS.
    #     Row (kh, w_in, ci), col (w, blk, c); the kw taps and the zero column
    #     padding are folded in (entries with w_in = w + kw - 1 outside [0,W)
    #     are simply absent).
    wt = jnp.concatenate(
        [jnp.transpose(w, (2, 3, 1, 0)) for w in conv_ws_oihw],
        axis=-1)                                           # (KH, KW, Cin, Call)
    b5 = jnp.zeros((KH, W, Cin, W, Call), jnp.float32)
    for dw in range(KW):
        sel = (jnp.arange(W)[:, None] == jnp.arange(W)[None, :] + dw - 1)
        b5 = b5 + (sel.astype(jnp.float32)[None, :, None, :, None]
                   * wt[:, dw][:, None, :, None, :])
    bconv = b5.reshape(KH * W * Cin, WCall)                # (192, 256)
    bias_c = jnp.tile(jnp.concatenate(conv_bs).reshape(1, Call), (1, W))

    # (2) fc weight rows pre-permuted from torch's (blk, c, h, w) flatten order
    #     to the kernel's (h, w, blk, c) order, output axis zero-padded to 128.
    wf = fc_w_torch.T.reshape(num_blocks, Cout, H, W, F)
    wf = jnp.transpose(wf, (2, 3, 0, 1, 4)).reshape(H * WCall, F)
    wf = jnp.pad(wf, ((0, 0), (0, Fp - F)))
    bias_f = jnp.pad(fc_b, (0, Fp - F)).reshape(1, Fp)

    # (3) Input packed (H, N, W*Cin) so kh shifts live on a free leading dim;
    #     batch zero-padded to a multiple of 8 sublanes.
    x_packed = jnp.transpose(x_nchw, (2, 0, 3, 1)).reshape(H, N, W * Cin)
    Np = _round_up(max(N, 8), 8)
    if Np != N:
        x_packed = jnp.pad(x_packed, ((0, 0), (0, Np - N), (0, 0)))

    if n_tile is None:
        n_tile = _pick_batch_tile(Np)
    grid = (Np // n_tile,)

    kernel = functools.partial(fused_kernel, H=H, W=W, Cin=Cin, Call=Call)
    out = pl.pallas_call(
        kernel,
        out_shape=jax.ShapeDtypeStruct((Np, Fp), jnp.float32),
        grid=grid,
        in_specs=[
            pl.BlockSpec((H, n_tile, W * Cin), lambda i: (0, i, 0)),
            pl.BlockSpec((KH * W * Cin, WCall), lambda i: (0, 0)),
            pl.BlockSpec((1, WCall), lambda i: (0, 0)),
            pl.BlockSpec((H * WCall, Fp), lambda i: (0, 0)),
            pl.BlockSpec((1, Fp), lambda i: (0, 0)),
        ],
        out_specs=pl.BlockSpec((n_tile, Fp), lambda i: (i, 0)),
        scratch_shapes=[
            pltpu.VMEM((H, n_tile, KH * W * Cin), jnp.float32)],
        compiler_params=pltpu.CompilerParams(
            dimension_semantics=("parallel",),
            vmem_limit_bytes=32 * 1024 * 1024),
    )(x_packed, bconv, bias_c, wf, bias_f)

    return out[:N, :F]


# Pure-JAX reference mirroring the PyTorch forward exactly.
def reference_forward(x_nchw, conv_ws_oihw, conv_bs, fc_w_torch, fc_b):
    feats = []
    for w, b in zip(conv_ws_oihw, conv_bs):
        y = jax.lax.conv_general_dilated(
            x_nchw, w, window_strides=(1, 1), padding=((1, 1), (1, 1)),
            dimension_numbers=("NCHW", "OIHW", "NCHW"))
        y = jnp.maximum(y + b[None, :, None, None], 0.0)
        feats.append(y.reshape(y.shape[0], -1))        # torch flatten (C,H,W)
    flat = jnp.concatenate(feats, axis=-1)
    return flat @ fc_w_torch.T + fc_b[None, :]


if __name__ == "__main__":
    N, Cin, H, W = 2, 4, 16, 16
    Cout, num_blocks, num_classes = 8, 2, 10

    key = jax.random.PRNGKey(0)
    keys = jax.random.split(key, 2 * num_blocks + 3)

    x = jax.random.normal(keys[0], (N, Cin, H, W), jnp.float32)
    conv_ws = [jax.random.normal(keys[1 + i], (Cout, Cin, KH, KW),
                                 jnp.float32) * 0.1
               for i in range(num_blocks)]
    conv_bs = [jax.random.normal(keys[1 + num_blocks + i], (Cout,),
                                 jnp.float32) * 0.1
               for i in range(num_blocks)]
    fc_w = jax.random.normal(keys[-2],
                             (num_classes, num_blocks * Cout * H * W),
                             jnp.float32) * 0.02
    fc_b = jax.random.normal(keys[-1], (num_classes,), jnp.float32) * 0.02

    out = jax.block_until_ready(
        cnn_parallel_forward(x, conv_ws, conv_bs, fc_w, fc_b))
    ref = jax.block_until_ready(
        reference_forward(x, conv_ws, conv_bs, fc_w, fc_b))

    assert out.shape == (N, num_classes), out.shape
    max_err = float(jnp.max(jnp.abs(out - ref)))
    assert jnp.allclose(out, ref, atol=5e-3, rtol=5e-3), max_err

    print("KERNEL_OK")
</pallas_src>

<mosaic_0001>
module attributes {stable_mosaic.version = 11 : i64} {
  func.func @fused_kernel(%arg0: i32, %arg1: memref<16x8x64xf32, #tpu.memory_space<vmem>>, %arg2: memref<192x256xf32, #tpu.memory_space<vmem>>, %arg3: memref<1x256xf32, #tpu.memory_space<vmem>>, %arg4: memref<4096x128xf32, #tpu.memory_space<vmem>>, %arg5: memref<1x128xf32, #tpu.memory_space<vmem>>, %arg6: memref<8x128xf32, #tpu.memory_space<vmem>>, %arg7: memref<16x8x192xf32, #tpu.memory_space<vmem>>) attributes {dimension_semantics = [#tpu.dimension_semantics<parallel>], iteration_bounds = array<i64: 1>, scalar_prefetch = 0 : i64, scratch_operands = 1 : i64, tpu.core_type = #tpu.core_type<tc>, window_params = [{transform_indices = @transform_0, window_bounds = array<i64: 16, 8, 64>}, {pipeline_mode = #tpu.pipeline_mode<synchronous>, transform_indices = @transform_1, window_bounds = array<i64: 192, 256>}, {pipeline_mode = #tpu.pipeline_mode<synchronous>, transform_indices = @transform_2, window_bounds = array<i64: 1, 256>}, {pipeline_mode = #tpu.pipeline_mode<synchronous>, transform_indices = @transform_3, window_bounds = array<i64: 4096, 128>}, {pipeline_mode = #tpu.pipeline_mode<synchronous>, transform_indices = @transform_4, window_bounds = array<i64: 1, 128>}, {transform_indices = @transform_5, window_bounds = array<i64: 8, 128>}]} {
    %cst = arith.constant 0.000000e+00 : f32
    %0 = vector.broadcast %cst : f32 to vector<1x8x64xf32>
    %c0 = arith.constant 0 : index
    %c0_0 = arith.constant 0 : index
    %c0_1 = arith.constant 0 : index
    %1 = vector.load %arg7[%c0, %c0_0, %c0_1] : memref<16x8x192xf32, #tpu.memory_space<vmem>>, vector<1x8x64xf32>
    tpu.vector_store %arg7[%c0, %c0_0, %c0_1], %0 {strides = array<i32>} : memref<16x8x192xf32, #tpu.memory_space<vmem>>, vector<1x8x64xf32>,
    %cst_2 = arith.constant 0.000000e+00 : f32
    %2 = vector.broadcast %cst_2 : f32 to vector<1x8x64xf32>
    %c15 = arith.constant 15 : index
    %c0_3 = arith.constant 0 : index
    %c128 = arith.constant 128 : index
    %3 = vector.load %arg7[%c15, %c0_3, %c128] : memref<16x8x192xf32, #tpu.memory_space<vmem>>, vector<1x8x64xf32>
    tpu.vector_store %arg7[%c15, %c0_3, %c128], %2 {strides = array<i32>} : memref<16x8x192xf32, #tpu.memory_space<vmem>>, vector<1x8x64xf32>,
    %c0_4 = arith.constant 0 : index
    %c0_5 = arith.constant 0 : index
    %c0_6 = arith.constant 0 : index
    %4 = vector.load %arg1[%c0_4, %c0_5, %c0_6] : memref<16x8x64xf32, #tpu.memory_space<vmem>>, vector<15x8x64xf32>
    %c1 = arith.constant 1 : index
    %c0_7 = arith.constant 0 : index
    %c0_8 = arith.constant 0 : index
    %5 = vector.load %arg7[%c1, %c0_7, %c0_8] : memref<16x8x192xf32, #tpu.memory_space<vmem>>, vector<15x8x64xf32>
    tpu.vector_store %arg7[%c1, %c0_7, %c0_8], %4 {strides = array<i32>} : memref<16x8x192xf32, #tpu.memory_space<vmem>>, vector<15x8x64xf32>,
    %c0_9 = arith.constant 0 : index
    %c0_10 = arith.constant 0 : index
    %c0_11 = arith.constant 0 : index
    %6 = vector.load %arg1[%c0_9, %c0_10, %c0_11] : memref<16x8x64xf32, #tpu.memory_space<vmem>>, vector<16x8x64xf32>
    %c0_12 = arith.constant 0 : index
    %c0_13 = arith.constant 0 : index
    %c64 = arith.constant 64 : index
    %7 = vector.load %arg7[%c0_12, %c0_13, %c64] : memref<16x8x192xf32, #tpu.memory_space<vmem>>, vector<16x8x64xf32>
    tpu.vector_store %arg7[%c0_12, %c0_13, %c64], %6 {strides = array<i32>} : memref<16x8x192xf32, #tpu.memory_space<vmem>>, vector<16x8x64xf32>,
    %c1_14 = arith.constant 1 : index
    %c0_15 = arith.constant 0 : index
    %c0_16 = arith.constant 0 : index
    %8 = vector.load %arg1[%c1_14, %c0_15, %c0_16] : memref<16x8x64xf32, #tpu.memory_space<vmem>>, vector<15x8x64xf32>
    %c0_17 = arith.constant 0 : index
    %c0_18 = arith.constant 0 : index
    %c128_19 = arith.constant 128 : index
    %9 = vector.load %arg7[%c0_17, %c0_18, %c128_19] : memref<16x8x192xf32, #tpu.memory_space<vmem>>, vector<15x8x64xf32>
    tpu.vector_store %arg7[%c0_17, %c0_18, %c128_19], %8 {strides = array<i32>} : memref<16x8x192xf32, #tpu.memory_space<vmem>>, vector<15x8x64xf32>,
    %c0_20 = arith.constant 0 : index
    %c0_21 = arith.constant 0 : index
    %c0_22 = arith.constant 0 : index
    %10 = vector.load %arg7[%c0_20, %c0_21, %c0_22] : memref<16x8x192xf32, #tpu.memory_space<vmem>>, vector<16x8x192xf32>
    %11 = vector.shape_cast %10 : vector<16x8x192xf32> to vector<128x192xf32>
    %c0_23 = arith.constant 0 : index
    %c0_24 = arith.constant 0 : index
    %12 = vector.load %arg2[%c0_23, %c0_24] : memref<192x256xf32, #tpu.memory_space<vmem>>, vector<192x256xf32>
    %cst_25 = arith.constant dense<0.000000e+00> : vector<128x256xf32>
    %13 = tpu.matmul %11, %12, %cst_25 {dimension_numbers = #tpu.dot_dimension_numbers<[1], [0], [0], [1], [0, 0, 1, 1], [], []>} : vector<128x192xf32>, vector<192x256xf32>, vector<128x256xf32> -> vector<128x256xf32>
    %c0_26 = arith.constant 0 : index
    %c0_27 = arith.constant 0 : index
    %14 = vector.load %arg3[%c0_26, %c0_27] : memref<1x256xf32, #tpu.memory_space<vmem>>, vector<1x256xf32>
    %15 = vector.broadcast %14 : vector<1x256xf32> to vector<128x256xf32>
    %16 = arith.addf %13, %15 : vector<128x256xf32>
    %cst_28 = arith.constant 0.000000e+00 : f32
    %17 = vector.broadcast %cst_28 : f32 to vector<128x256xf32>
    %18 = arith.maximumf %16, %17 : vector<128x256xf32>
    %cst_29 = arith.constant 0.000000e+00 : f32
    %19 = vector.broadcast %cst_29 : f32 to vector<8x128xf32>
    %20 = vector.extract_strided_slice %18 {offsets = [0, 0], sizes = [8, 256], strides = [1, 1]} : vector<128x256xf32> to vector<8x256xf32>
    %c0_30 = arith.constant 0 : index
    %c0_31 = arith.constant 0 : index
    %21 = vector.load %arg4[%c0_30, %c0_31] : memref<4096x128xf32, #tpu.memory_space<vmem>>, vector<256x128xf32>
    %cst_32 = arith.constant dense<0.000000e+00> : vector<8x128xf32>
    %22 = tpu.matmul %20, %21, %cst_32 {dimension_numbers = #tpu.dot_dimension_numbers<[1], [0], [0], [1], [0, 0, 1, 1], [], []>} : vector<8x256xf32>, vector<256x128xf32>, vector<8x128xf32> -> vector<8x128xf32>
    %23 = arith.addf %19, %22 : vector<8x128xf32>
    %24 = vector.extract_strided_slice %18 {offsets = [8, 0], sizes = [8, 256], strides = [1, 1]} : vector<128x256xf32> to vector<8x256xf32>
    %c256 = arith.constant 256 : index
    %c0_33 = arith.constant 0 : index
    %25 = vector.load %arg4[%c256, %c0_33] : memref<4096x128xf32, #tpu.memory_space<vmem>>, vector<256x128xf32>
    %cst_34 = arith.constant dense<0.000000e+00> : vector<8x128xf32>
    %26 = tpu.matmul %24, %25, %cst_34 {dimension_numbers = #tpu.dot_dimension_numbers<[1], [0], [0], [1], [0, 0, 1, 1], [], []>} : vector<8x256xf32>, vector<256x128xf32>, vector<8x128xf32> -> vector<8x128xf32>
    %27 = arith.addf %23, %26 : vector<8x128xf32>
    %28 = vector.extract_strided_slice %18 {offsets = [16, 0], sizes = [8, 256], strides = [1, 1]} : vector<128x256xf32> to vector<8x256xf32>
    %c512 = arith.constant 512 : index
    %c0_35 = arith.constant 0 : index
    %29 = vector.load %arg4[%c512, %c0_35] : memref<4096x128xf32, #tpu.memory_space<vmem>>, vector<256x128xf32>
    %cst_36 = arith.constant dense<0.000000e+00> : vector<8x128xf32>
    %30 = tpu.matmul %28, %29, %cst_36 {dimension_numbers = #tpu.dot_dimension_numbers<[1], [0], [0], [1], [0, 0, 1, 1], [], []>} : vector<8x256xf32>, vector<256x128xf32>, vector<8x128xf32> -> vector<8x128xf32>
    %31 = arith.addf %27, %30 : vector<8x128xf32>
    %32 = vector.extract_strided_slice %18 {offsets = [24, 0], sizes = [8, 256], strides = [1, 1]} : vector<128x256xf32> to vector<8x256xf32>
    %c768 = arith.constant 768 : index
    %c0_37 = arith.constant 0 : index
    %33 = vector.load %arg4[%c768, %c0_37] : memref<4096x128xf32, #tpu.memory_space<vmem>>, vector<256x128xf32>
    %cst_38 = arith.constant dense<0.000000e+00> : vector<8x128xf32>
    %34 = tpu.matmul %32, %33, %cst_38 {dimension_numbers = #tpu.dot_dimension_numbers<[1], [0], [0], [1], [0, 0, 1, 1], [], []>} : vector<8x256xf32>, vector<256x128xf32>, vector<8x128xf32> -> vector<8x128xf32>
    %35 = arith.addf %31, %34 : vector<8x128xf32>
    %36 = vector.extract_strided_slice %18 {offsets = [32, 0], sizes = [8, 256], strides = [1, 1]} : vector<128x256xf32> to vector<8x256xf32>
    %c1024 = arith.constant 1024 : index
    %c0_39 = arith.constant 0 : index
    %37 = vector.load %arg4[%c1024, %c0_39] : memref<4096x128xf32, #tpu.memory_space<vmem>>, vector<256x128xf32>
    %cst_40 = arith.constant dense<0.000000e+00> : vector<8x128xf32>
    %38 = tpu.matmul %36, %37, %cst_40 {dimension_numbers = #tpu.dot_dimension_numbers<[1], [0], [0], [1], [0, 0, 1, 1], [], []>} : vector<8x256xf32>, vector<256x128xf32>, vector<8x128xf32> -> vector<8x128xf32>
    %39 = arith.addf %35, %38 : vector<8x128xf32>
    %40 = vector.extract_strided_slice %18 {offsets = [40, 0], sizes = [8, 256], strides = [1, 1]} : vector<128x256xf32> to vector<8x256xf32>
    %c1280 = arith.constant 1280 : index
    %c0_41 = arith.constant 0 : index
    %41 = vector.load %arg4[%c1280, %c0_41] : memref<4096x128xf32, #tpu.memory_space<vmem>>, vector<256x128xf32>
    %cst_42 = arith.constant dense<0.000000e+00> : vector<8x128xf32>
    %42 = tpu.matmul %40, %41, %cst_42 {dimension_numbers = #tpu.dot_dimension_numbers<[1], [0], [0], [1], [0, 0, 1, 1], [], []>} : vector<8x256xf32>, vector<256x128xf32>, vector<8x128xf32> -> vector<8x128xf32>
    %43 = arith.addf %39, %42 : vector<8x128xf32>
    %44 = vector.extract_strided_slice %18 {offsets = [48, 0], sizes = [8, 256], strides = [1, 1]} : vector<128x256xf32> to vector<8x256xf32>
    %c1536 = arith.constant 1536 : index
    %c0_43 = arith.constant 0 : index
    %45 = vector.load %arg4[%c1536, %c0_43] : memref<4096x128xf32, #tpu.memory_space<vmem>>, vector<256x128xf32>
    %cst_44 = arith.constant dense<0.000000e+00> : vector<8x128xf32>
    %46 = tpu.matmul %44, %45, %cst_44 {dimension_numbers = #tpu.dot_dimension_numbers<[1], [0], [0], [1], [0, 0, 1, 1], [], []>} : vector<8x256xf32>, vector<256x128xf32>, vector<8x128xf32> -> vector<8x128xf32>
    %47 = arith.addf %43, %46 : vector<8x128xf32>
    %48 = vector.extract_strided_slice %18 {offsets = [56, 0], sizes = [8, 256], strides = [1, 1]} : vector<128x256xf32> to vector<8x256xf32>
    %c1792 = arith.constant 1792 : index
    %c0_45 = arith.constant 0 : index
    %49 = vector.load %arg4[%c1792, %c0_45] : memref<4096x128xf32, #tpu.memory_space<vmem>>, vector<256x128xf32>
    %cst_46 = arith.constant dense<0.000000e+00> : vector<8x128xf32>
    %50 = tpu.matmul %48, %49, %cst_46 {dimension_numbers = #tpu.dot_dimension_numbers<[1], [0], [0], [1], [0, 0, 1, 1], [], []>} : vector<8x256xf32>, vector<256x128xf32>, vector<8x128xf32> -> vector<8x128xf32>
    %51 = arith.addf %47, %50 : vector<8x128xf32>
    %52 = vector.extract_strided_slice %18 {offsets = [64, 0], sizes = [8, 256], strides = [1, 1]} : vector<128x256xf32> to vector<8x256xf32>
    %c2048 = arith.constant 2048 : index
    %c0_47 = arith.constant 0 : index
    %53 = vector.load %arg4[%c2048, %c0_47] : memref<4096x128xf32, #tpu.memory_space<vmem>>, vector<256x128xf32>
    %cst_48 = arith.constant dense<0.000000e+00> : vector<8x128xf32>
    %54 = tpu.matmul %52, %53, %cst_48 {dimension_numbers = #tpu.dot_dimension_numbers<[1], [0], [0], [1], [0, 0, 1, 1], [], []>} : vector<8x256xf32>, vector<256x128xf32>, vector<8x128xf32> -> vector<8x128xf32>
    %55 = arith.addf %51, %54 : vector<8x128xf32>
    %56 = vector.extract_strided_slice %18 {offsets = [72, 0], sizes = [8, 256], strides = [1, 1]} : vector<128x256xf32> to vector<8x256xf32>
    %c2304 = arith.constant 2304 : index
    %c0_49 = arith.constant 0 : index
    %57 = vector.load %arg4[%c2304, %c0_49] : memref<4096x128xf32, #tpu.memory_space<vmem>>, vector<256x128xf32>
    %cst_50 = arith.constant dense<0.000000e+00> : vector<8x128xf32>
    %58 = tpu.matmul %56, %57, %cst_50 {dimension_numbers = #tpu.dot_dimension_numbers<[1], [0], [0], [1], [0, 0, 1, 1], [], []>} : vector<8x256xf32>, vector<256x128xf32>, vector<8x128xf32> -> vector<8x128xf32>
    %59 = arith.addf %55, %58 : vector<8x128xf32>
    %60 = vector.extract_strided_slice %18 {offsets = [80, 0], sizes = [8, 256], strides = [1, 1]} : vector<128x256xf32> to vector<8x256xf32>
    %c2560 = arith.constant 2560 : index
    %c0_51 = arith.constant 0 : index
    %61 = vector.load %arg4[%c2560, %c0_51] : memref<4096x128xf32, #tpu.memory_space<vmem>>, vector<256x128xf32>
    %cst_52 = arith.constant dense<0.000000e+00> : vector<8x128xf32>
    %62 = tpu.matmul %60, %61, %cst_52 {dimension_numbers = #tpu.dot_dimension_numbers<[1], [0], [0], [1], [0, 0, 1, 1], [], []>} : vector<8x256xf32>, vector<256x128xf32>, vector<8x128xf32> -> vector<8x128xf32>
    %63 = arith.addf %59, %62 : vector<8x128xf32>
    %64 = vector.extract_strided_slice %18 {offsets = [88, 0], sizes = [8, 256], strides = [1, 1]} : vector<128x256xf32> to vector<8x256xf32>
    %c2816 = arith.constant 2816 : index
    %c0_53 = arith.constant 0 : index
    %65 = vector.load %arg4[%c2816, %c0_53] : memref<4096x128xf32, #tpu.memory_space<vmem>>, vector<256x128xf32>
    %cst_54 = arith.constant dense<0.000000e+00> : vector<8x128xf32>
    %66 = tpu.matmul %64, %65, %cst_54 {dimension_numbers = #tpu.dot_dimension_numbers<[1], [0], [0], [1], [0, 0, 1, 1], [], []>} : vector<8x256xf32>, vector<256x128xf32>, vector<8x128xf32> -> vector<8x128xf32>
    %67 = arith.addf %63, %66 : vector<8x128xf32>
    %68 = vector.extract_strided_slice %18 {offsets = [96, 0], sizes = [8, 256], strides = [1, 1]} : vector<128x256xf32> to vector<8x256xf32>
    %c3072 = arith.constant 3072 : index
    %c0_55 = arith.constant 0 : index
    %69 = vector.load %arg4[%c3072, %c0_55] : memref<4096x128xf32, #tpu.memory_space<vmem>>, vector<256x128xf32>
    %cst_56 = arith.constant dense<0.000000e+00> : vector<8x128xf32>
    %70 = tpu.matmul %68, %69, %cst_56 {dimension_numbers = #tpu.dot_dimension_numbers<[1], [0], [0], [1], [0, 0, 1, 1], [], []>} : vector<8x256xf32>, vector<256x128xf32>, vector<8x128xf32> -> vector<8x128xf32>
    %71 = arith.addf %67, %70 : vector<8x128xf32>
    %72 = vector.extract_strided_slice %18 {offsets = [104, 0], sizes = [8, 256], strides = [1, 1]} : vector<128x256xf32> to vector<8x256xf32>
    %c3328 = arith.constant 3328 : index
    %c0_57 = arith.constant 0 : index
    %73 = vector.load %arg4[%c3328, %c0_57] : memref<4096x128xf32, #tpu.memory_space<vmem>>, vector<256x128xf32>
    %cst_58 = arith.constant dense<0.000000e+00> : vector<8x128xf32>
    %74 = tpu.matmul %72, %73, %cst_58 {dimension_numbers = #tpu.dot_dimension_numbers<[1], [0], [0], [1], [0, 0, 1, 1], [], []>} : vector<8x256xf32>, vector<256x128xf32>, vector<8x128xf32> -> vector<8x128xf32>
    %75 = arith.addf %71, %74 : vector<8x128xf32>
    %76 = vector.extract_strided_slice %18 {offsets = [112, 0], sizes = [8, 256], strides = [1, 1]} : vector<128x256xf32> to vector<8x256xf32>
    %c3584 = arith.constant 3584 : index
    %c0_59 = arith.constant 0 : index
    %77 = vector.load %arg4[%c3584, %c0_59] : memref<4096x128xf32, #tpu.memory_space<vmem>>, vector<256x128xf32>
    %cst_60 = arith.constant dense<0.000000e+00> : vector<8x128xf32>
    %78 = tpu.matmul %76, %77, %cst_60 {dimension_numbers = #tpu.dot_dimension_numbers<[1], [0], [0], [1], [0, 0, 1, 1], [], []>} : vector<8x256xf32>, vector<256x128xf32>, vector<8x128xf32> -> vector<8x128xf32>
    %79 = arith.addf %75, %78 : vector<8x128xf32>
    %80 = vector.extract_strided_slice %18 {offsets = [120, 0], sizes = [8, 256], strides = [1, 1]} : vector<128x256xf32> to vector<8x256xf32>
    %c3840 = arith.constant 3840 : index
    %c0_61 = arith.constant 0 : index
    %81 = vector.load %arg4[%c3840, %c0_61] : memref<4096x128xf32, #tpu.memory_space<vmem>>, vector<256x128xf32>
    %cst_62 = arith.constant dense<0.000000e+00> : vector<8x128xf32>
    %82 = tpu.matmul %80, %81, %cst_62 {dimension_numbers = #tpu.dot_dimension_numbers<[1], [0], [0], [1], [0, 0, 1, 1], [], []>} : vector<8x256xf32>, vector<256x128xf32>, vector<8x128xf32> -> vector<8x128xf32>
    %83 = arith.addf %79, %82 : vector<8x128xf32>
    %c0_63 = arith.constant 0 : index
    %c0_64 = arith.constant 0 : index
    %84 = vector.load %arg5[%c0_63, %c0_64] : memref<1x128xf32, #tpu.memory_space<vmem>>, vector<1x128xf32>
    %85 = vector.broadcast %84 : vector<1x128xf32> to vector<8x128xf32>
    %86 = arith.addf %83, %85 : vector<8x128xf32>
    %c0_65 = arith.constant 0 : index
    %c0_66 = arith.constant 0 : index
    %87 = vector.load %arg6[%c0_65, %c0_66] : memref<8x128xf32, #tpu.memory_space<vmem>>, vector<8x128xf32>
    tpu.vector_store %arg6[%c0_65, %c0_66], %86 {strides = array<i32>} : memref<8x128xf32, #tpu.memory_space<vmem>>, vector<8x128xf32>,
    return
  }
  func.func @transform_0(%arg0: i32) -> (i32, i32, i32) {
    %c0_i32 = arith.constant 0 : i32
    %c0_i32_0 = arith.constant 0 : i32
    %c0_i32_1 = arith.constant 0 : i32
    return %c0_i32, %arg0, %c0_i32_0 : i32, i32, i32
  }
  func.func @transform_1(%arg0: i32) -> (i32, i32) {
    %c0_i32 = arith.constant 0 : i32
    %c0_i32_0 = arith.constant 0 : i32
    %c0_i32_1 = arith.constant 0 : i32
    return %c0_i32, %c0_i32_0 : i32, i32
  }
  func.func @transform_2(%arg0: i32) -> (i32, i32) {
    %c0_i32 = arith.constant 0 : i32
    %c0_i32_0 = arith.constant 0 : i32
    %c0_i32_1 = arith.constant 0 : i32
    return %c0_i32, %c0_i32_0 : i32, i32
  }
  func.func @transform_3(%arg0: i32) -> (i32, i32) {
    %c0_i32 = arith.constant 0 : i32
    %c0_i32_0 = arith.constant 0 : i32
    %c0_i32_1 = arith.constant 0 : i32
    return %c0_i32, %c0_i32_0 : i32, i32
  }
  func.func @transform_4(%arg0: i32) -> (i32, i32) {
    %c0_i32 = arith.constant 0 : i32
    %c0_i32_0 = arith.constant 0 : i32
    %c0_i32_1 = arith.constant 0 : i32
    return %c0_i32, %c0_i32_0 : i32, i32
  }
  func.func @transform_5(%arg0: i32) -> (i32, i32) {
    %c0_i32 = arith.constant 0 : i32
    %c0_i32_0 = arith.constant 0 : i32
    return %arg0, %c0_i32 : i32, i32
  }
}

</mosaic_0001>

<llo_original>
// kernel: tpu_custom_call.1
$region0: #{tpu_custom_call.1}
  #allocation0 [shape = 'u32[]', space=smem, size = 0x4, offset = 0x4, fixed_abs, tag = 'smem constant byte address 0x4 - core index']
  #allocation1 [shape = 'u32[144,128]{1,0:T(1,128)}', space=vmem, size = 0x12000, scoped, tag = 'internal scratch']
  #allocation2 [shape = 'f32[16,8,192]{2,1,0:T(8,128)}', space=vmem, size = 0x20000, scoped, tag = 'scratch operand']
  %s0 = inlined_call_operand.hbm [shape: f32[16,8,64], index: 0, kind: input, shape index: {}]
  %s1 = inlined_call_operand.hbm [shape: f32[192,256], index: 1, kind: input, shape index: {}]
  %s2 = inlined_call_operand.hbm [shape: f32[1,256], index: 2, kind: input, shape index: {}]
  %s3 = inlined_call_operand.hbm [shape: f32[4096,128], index: 3, kind: input, shape index: {}]
  %s4 = inlined_call_operand.hbm [shape: f32[1,128], index: 4, kind: input, shape index: {}]
  %s5 = inlined_call_operand.hbm [shape: f32[8,128], index: 5, kind: output, shape index: {}]
  %s6 = sld [smem:[#allocation0]]
  $region50: #{tpu_custom_call.1} parent=0
    _
  %s8 = ssub.s32 1, %s6
  %s9 = scalar_select 0, %s8, %s6
  $region1: #{tpu_custom_call.1} parent=0
    #allocation3 [shape = 'u8[65536]{0}', space=vmem, size = 0x10000, scoped, tag = 'input window, operand 0, single buffered']
    #allocation4 [shape = 's32[1]{0}', space=sflag, size = 0x4, scoped, tag = 'scoped memory for tpu_custom_call.1']
    #allocation5 [shape = 's32[1]{0}', space=sflag, size = 0x4, scoped, tag = 'scoped memory for tpu_custom_call.1']
    #allocation6 [shape = 'u8[196608]{0}', space=vmem, size = 0x30000, scoped, tag = 'input window, operand 1, single buffered']
    #allocation7 [shape = 's32[1]{0}', space=sflag, size = 0x4, scoped, tag = 'scoped memory for tpu_custom_call.1']
    #allocation8 [shape = 'u8[1024]{0}', space=vmem, size = 0x400, scoped, tag = 'input window, operand 2, single buffered']
    #allocation9 [shape = 'u8[2097152]{0}', space=vmem, size = 0x200000, scoped, tag = 'input window, operand 3, single buffered']
    #allocation10 [shape = 's32[1]{0}', space=sflag, size = 0x4, scoped, tag = 'scoped memory for tpu_custom_call.1']
    #allocation11 [shape = 'u8[512]{0}', space=vmem, size = 0x400, scoped, tag = 'input window, operand 4, single buffered']
    #allocation12 [shape = 'u8[4096]{0}', space=vmem, size = 0x1000, scoped, tag = 'output window, operand 0, single buffered']
    %10 = vsyncpa [#allocation4], 0
    %11 = vsyncpa [#allocation7], 0
    %12 = vsyncpa [#allocation10], 0
    %13 = vsyncpa [#allocation5], 0
    // Predicated region
    $region2: #{tpu_custom_call.1} parent=1 // pred_check
      _
    $region3: #{tpu_custom_call.1} parent=1 // pred_check_branch
      %15 = sbr.rel (0) target = $region5
    $region4: #{tpu_custom_call.1} parent=1 // pred_region
      %s17 = ssub.s32 2048, 2048
      %18 = vsyncadd [#allocation4], %s17
      %s19 = sshll.u32 [#allocation3], 4
      %s20 = int_to_ptr.vmem [resolvable:$true] %s19
      %25 = dma.hbm_to_vmem [thread:$0]  %s0, 2048, %s20, [#allocation4], 128, 128, 8
    $region5: #{tpu_custom_call.1} parent=1 // pred_fallthru
      _
    // Predicated region
    $region6: #{tpu_custom_call.1} parent=1 // pred_check
      _
    $region7: #{tpu_custom_call.1} parent=1 // pred_check_branch
      %27 = sbr.rel (0) target = $region9
    $region8: #{tpu_custom_call.1} parent=1 // pred_region
      %s29 = ssub.s32 6144, 6144
      %30 = vsyncadd [#allocation7], %s29
      %s31 = sshll.u32 [#allocation6], 4
      %s32 = int_to_ptr.vmem [resolvable:$true] %s31
      %37 = dma.hbm_to_vmem [thread:$0]  %s1, 6144, %s32, [#allocation7], 256, 256, 16
    $region9: #{tpu_custom_call.1} parent=1 // pred_fallthru
      _
    // Predicated region
    $region10: #{tpu_custom_call.1} parent=1 // pred_check
      _
    $region11: #{tpu_custom_call.1} parent=1 // pred_check_branch
      %39 = sbr.rel (0) target = $region13
    $region12: #{tpu_custom_call.1} parent=1 // pred_region
      %s41 = ssub.s32 32, 32
      %42 = vsyncadd [#allocation7], %s41
      %s44 = sshll.u32 [#allocation8], 4
      %s45 = int_to_ptr.vmem [resolvable:$true] %s44
      %47 = dma.hbm_to_vmem [thread:$0]  %s2, 32, %s45, [#allocation7]
    $region13: #{tpu_custom_call.1} parent=1 // pred_fallthru
      _
    // Predicated region
    $region14: #{tpu_custom_call.1} parent=1 // pred_check
      _
    $region15: #{tpu_custom_call.1} parent=1 // pred_check_branch
      %49 = sbr.rel (0) target = $region17
    $region16: #{tpu_custom_call.1} parent=1 // pred_region
      %s51 = ssub.s32 65536, 65536
      %52 = vsyncadd [#allocation10], %s51
      %s53 = sshll.u32 [#allocation9], 4
      %s54 = int_to_ptr.vmem [resolvable:$true] %s53
      %59 = dma.hbm_to_vmem [thread:$0]  %s3, 65536, %s54, [#allocation10], 128, 128, 8
    $region17: #{tpu_custom_call.1} parent=1 // pred_fallthru
      _
    // Predicated region
    $region18: #{tpu_custom_call.1} parent=1 // pred_check
      _
    $region19: #{tpu_custom_call.1} parent=1 // pred_check_branch
      %61 = sbr.rel (0) target = $region21
    $region20: #{tpu_custom_call.1} parent=1 // pred_region
      %s63 = ssub.s32 16, 16
      %64 = vsyncadd [#allocation10], %s63
      %s66 = sshll.u32 [#allocation11], 4
      %s67 = int_to_ptr.vmem [resolvable:$true] %s66
      %69 = dma.hbm_to_vmem [thread:$0]  %s4, 16, %s67, [#allocation10]
    $region21: #{tpu_custom_call.1} parent=1 // pred_fallthru
      _
    // Predicated region
    $region22: #{tpu_custom_call.1} parent=1 // pred_check
      _
    $region23: #{tpu_custom_call.1} parent=1 // pred_check_branch
      %71 = sbr.rel (0) target = $region25
    $region24: #{tpu_custom_call.1} parent=1 // pred_region
      %72 = dma.done [#allocation4], 2048
    $region25: #{tpu_custom_call.1} parent=1 // pred_fallthru
      _
    // Predicated region
    $region26: #{tpu_custom_call.1} parent=1 // pred_check
      _
    $region27: #{tpu_custom_call.1} parent=1 // pred_check_branch
      %74 = sbr.rel (0) target = $region29
    $region28: #{tpu_custom_call.1} parent=1 // pred_region
      %75 = dma.done [#allocation7], 6144
    $region29: #{tpu_custom_call.1} parent=1 // pred_fallthru
      _
    // Predicated region
    $region30: #{tpu_custom_call.1} parent=1 // pred_check
      _
    $region31: #{tpu_custom_call.1} parent=1 // pred_check_branch
      %77 = sbr.rel (0) target = $region33
    $region32: #{tpu_custom_call.1} parent=1 // pred_region
      %78 = dma.done [#allocation7], 32
    $region33: #{tpu_custom_call.1} parent=1 // pred_fallthru
      _
    // Predicated region
    $region34: #{tpu_custom_call.1} parent=1 // pred_check
      _
    $region35: #{tpu_custom_call.1} parent=1 // pred_check_branch
      %80 = sbr.rel (0) target = $region37
    $region36: #{tpu_custom_call.1} parent=1 // pred_region
      %81 = dma.done [#allocation10], 65536
    $region37: #{tpu_custom_call.1} parent=1 // pred_fallthru
      _
    // Predicated region
    $region38: #{tpu_custom_call.1} parent=1 // pred_check
      _
    $region39: #{tpu_custom_call.1} parent=1 // pred_check_branch
      %83 = sbr.rel (0) target = $region41
    $region40: #{tpu_custom_call.1} parent=1 // pred_region
      %84 = dma.done [#allocation10], 16
    $region41: #{tpu_custom_call.1} parent=1 // pred_fallthru
      _
    %vm85 = vcmask 523264
    %86 = vst.msk [vmem:[#allocation2] sm:$0xff] %vm85, 0.0
    %s87 = scalar_lea.vmem [#allocation2], 240
    %88 = vst.msk [vmem:[%s87 + $0x8] sm:$0xff] %vm85, 0.0
    %v89 = vld [vmem:[#allocation3] sm:$0xff]
    %v90 = vld [vmem:[#allocation3 + $0x8] sm:$0xff]
    %v91 = vld [vmem:[#allocation3 + $0x10] sm:$0xff]
    %v92 = vld [vmem:[#allocation3 + $0x18] sm:$0xff]
    %v93 = vld [vmem:[#allocation3 + $0x20] sm:$0xff]
    %v94 = vld [vmem:[#allocation3 + $0x28] sm:$0xff]
    %v95 = vld [vmem:[#allocation3 + $0x30] sm:$0xff]
    %v96 = vld [vmem:[#allocation3 + $0x38] sm:$0xff]
    %v97 = vld [vmem:[#allocation3 + $0x40] sm:$0xff]
    %v98 = vld [vmem:[#allocation3 + $0x48] sm:$0xff]
    %v99 = vld [vmem:[#allocation3 + $0x50] sm:$0xff]
    %v100 = vld [vmem:[#allocation3 + $0x58] sm:$0xff]
    %v101 = vld [vmem:[#allocation3 + $0x60] sm:$0xff]
    %v102 = vld [vmem:[#allocation3 + $0x68] sm:$0xff]
    %v103 = vld [vmem:[#allocation3 + $0x70] sm:$0xff]
    %s104 = scalar_lea.vmem [#allocation2], 16
    %105 = vst.msk [vmem:[%s104] sm:$0xff] %vm85, %v89
    %106 = vst.msk [vmem:[%s104 + $0x10] sm:$0xff] %vm85, %v90
    %107 = vst.msk [vmem:[%s104 + $0x20] sm:$0xff] %vm85, %v91
    %108 = vst.msk [vmem:[%s104 + $0x30] sm:$0xff] %vm85, %v92
    %109 = vst.msk [vmem:[%s104 + $0x40] sm:$0xff] %vm85, %v93
    %110 = vst.msk [vmem:[%s104 + $0x50] sm:$0xff] %vm85, %v94
    %111 = vst.msk [vmem:[%s104 + $0x60] sm:$0xff] %vm85, %v95
    %112 = vst.msk [vmem:[%s104 + $0x70] sm:$0xff] %vm85, %v96
    %113 = vst.msk [vmem:[%s104 + $0x80] sm:$0xff] %vm85, %v97
    %114 = vst.msk [vmem:[%s104 + $0x90] sm:$0xff] %vm85, %v98
    %115 = vst.msk [vmem:[%s104 + $0xa0] sm:$0xff] %vm85, %v99
    %116 = vst.msk [vmem:[%s104 + $0xb0] sm:$0xff] %vm85, %v100
    %117 = vst.msk [vmem:[%s104 + $0xc0] sm:$0xff] %vm85, %v101
    %118 = vst.msk [vmem:[%s104 + $0xd0] sm:$0xff] %vm85, %v102
    %119 = vst.msk [vmem:[%s104 + $0xe0] sm:$0xff] %vm85, %v103
    %v120 = vld [vmem:[#allocation3] sm:$0xff]
    %v121 = vld [vmem:[#allocation3 + $0x8] sm:$0xff]
    %v122 = vld [vmem:[#allocation3 + $0x10] sm:$0xff]
    %v123 = vld [vmem:[#allocation3 + $0x18] sm:$0xff]
    %v124 = vld [vmem:[#allocation3 + $0x20] sm:$0xff]
    %v125 = vld [vmem:[#allocation3 + $0x28] sm:$0xff]
    %v126 = vld [vmem:[#allocation3 + $0x30] sm:$0xff]
    %v127 = vld [vmem:[#allocation3 + $0x38] sm:$0xff]
    %v128 = vld [vmem:[#allocation3 + $0x40] sm:$0xff]
    %v129 = vld [vmem:[#allocation3 + $0x48] sm:$0xff]
    %v130 = vld [vmem:[#allocation3 + $0x50] sm:$0xff]
    %v131 = vld [vmem:[#allocation3 + $0x58] sm:$0xff]
    %v132 = vld [vmem:[#allocation3 + $0x60] sm:$0xff]
    %v133 = vld [vmem:[#allocation3 + $0x68] sm:$0xff]
    %v134 = vld [vmem:[#allocation3 + $0x70] sm:$0xff]
    %v135 = vld [vmem:[#allocation3 + $0x78] sm:$0xff]
    %152 = vrot.lane.b32.xlu0 %v120, 64
    %v153 = vpop.permute.xlu0 %152
    %154 = vrot.lane.b32.xlu0 %v121, 64
    %v155 = vpop.permute.xlu0 %154
    %156 = vrot.lane.b32.xlu0 %v122, 64
    %v157 = vpop.permute.xlu0 %156
    %158 = vrot.lane.b32.xlu0 %v123, 64
    %v159 = vpop.permute.xlu0 %158
    %160 = vrot.lane.b32.xlu0 %v124, 64
    %v161 = vpop.permute.xlu0 %160
    %162 = vrot.lane.b32.xlu0 %v125, 64
    %v163 = vpop.permute.xlu0 %162
    %164 = vrot.lane.b32.xlu0 %v126, 64
    %v165 = vpop.permute.xlu0 %164
    %166 = vrot.lane.b32.xlu0 %v127, 64
    %v167 = vpop.permute.xlu0 %166
    %168 = vrot.lane.b32.xlu0 %v128, 64
    %v169 = vpop.permute.xlu0 %168
    %170 = vrot.lane.b32.xlu0 %v129, 64
    %v171 = vpop.permute.xlu0 %170
    %172 = vrot.lane.b32.xlu0 %v130, 64
    %v173 = vpop.permute.xlu0 %172
    %174 = vrot.lane.b32.xlu0 %v131, 64
    %v175 = vpop.permute.xlu0 %174
    %176 = vrot.lane.b32.xlu0 %v132, 64
    %v177 = vpop.permute.xlu0 %176
    %178 = vrot.lane.b32.xlu0 %v133, 64
    %v179 = vpop.permute.xlu0 %178
    %180 = vrot.lane.b32.xlu0 %v134, 64
    %v181 = vpop.permute.xlu0 %180
    %182 = vrot.lane.b32.xlu0 %v135, 64
    %v183 = vpop.permute.xlu0 %182
    %vm200 = vcmask 1048064
    %201 = vst.msk [vmem:[#allocation2] sm:$0xff] %vm200, %v153
    %202 = vst.msk [vmem:[#allocation2 + $0x10] sm:$0xff] %vm200, %v155
    %203 = vst.msk [vmem:[#allocation2 + $0x20] sm:$0xff] %vm200, %v157
    %204 = vst.msk [vmem:[#allocation2 + $0x30] sm:$0xff] %vm200, %v159
    %205 = vst.msk [vmem:[#allocation2 + $0x40] sm:$0xff] %vm200, %v161
    %206 = vst.msk [vmem:[#allocation2 + $0x50] sm:$0xff] %vm200, %v163
    %207 = vst.msk [vmem:[#allocation2 + $0x60] sm:$0xff] %vm200, %v165
    %208 = vst.msk [vmem:[#allocation2 + $0x70] sm:$0xff] %vm200, %v167
    %209 = vst.msk [vmem:[#allocation2 + $0x80] sm:$0xff] %vm200, %v169
    %210 = vst.msk [vmem:[#allocation2 + $0x90] sm:$0xff] %vm200, %v171
    %211 = vst.msk [vmem:[#allocation2 + $0xa0] sm:$0xff] %vm200, %v173
    %212 = vst.msk [vmem:[#allocation2 + $0xb0] sm:$0xff] %vm200, %v175
    %213 = vst.msk [vmem:[#allocation2 + $0xc0] sm:$0xff] %vm200, %v177
    %214 = vst.msk [vmem:[#allocation2 + $0xd0] sm:$0xff] %vm200, %v179
    %215 = vst.msk [vmem:[#allocation2 + $0xe0] sm:$0xff] %vm200, %v181
    %216 = vst.msk [vmem:[#allocation2 + $0xf0] sm:$0xff] %vm200, %v183
    %s217 = scalar_lea.vmem [#allocation3], 8
    %v218 = vld [vmem:[%s217] sm:$0xff]
    %v219 = vld [vmem:[%s217 + $0x8] sm:$0xff]
    %v220 = vld [vmem:[%s217 + $0x10] sm:$0xff]
    %v221 = vld [vmem:[%s217 + $0x18] sm:$0xff]
    %v222 = vld [vmem:[%s217 + $0x20] sm:$0xff]
    %v223 = vld [vmem:[%s217 + $0x28] sm:$0xff]
    %v224 = vld [vmem:[%s217 + $0x30] sm:$0xff]
    %v225 = vld [vmem:[%s217 + $0x38] sm:$0xff]
    %v226 = vld [vmem:[%s217 + $0x40] sm:$0xff]
    %v227 = vld [vmem:[%s217 + $0x48] sm:$0xff]
    %v228 = vld [vmem:[%s217 + $0x50] sm:$0xff]
    %v229 = vld [vmem:[%s217 + $0x58] sm:$0xff]
    %v230 = vld [vmem:[%s217 + $0x60] sm:$0xff]
    %v231 = vld [vmem:[%s217 + $0x68] sm:$0xff]
    %v232 = vld [vmem:[%s217 + $0x70] sm:$0xff]
    %233 = vst.msk [vmem:[#allocation2 + $0x8] sm:$0xff] %vm85, %v218
    %234 = vst.msk [vmem:[#allocation2 + $0x18] sm:$0xff] %vm85, %v219
    %235 = vst.msk [vmem:[#allocation2 + $0x28] sm:$0xff] %vm85, %v220
    %236 = vst.msk [vmem:[#allocation2 + $0x38] sm:$0xff] %vm85, %v221
    %237 = vst.msk [vmem:[#allocation2 + $0x48] sm:$0xff] %vm85, %v222
    %238 = vst.msk [vmem:[#allocation2 + $0x58] sm:$0xff] %vm85, %v223
    %239 = vst.msk [vmem:[#allocation2 + $0x68] sm:$0xff] %vm85, %v224
    %240 = vst.msk [vmem:[#allocation2 + $0x78] sm:$0xff] %vm85, %v225
    %241 = vst.msk [vmem:[#allocation2 + $0x88] sm:$0xff] %vm85, %v226
    %242 = vst.msk [vmem:[#allocation2 + $0x98] sm:$0xff] %vm85, %v227
    %243 = vst.msk [vmem:[#allocation2 + $0xa8] sm:$0xff] %vm85, %v228
    %244 = vst.msk [vmem:[#allocation2 + $0xb8] sm:$0xff] %vm85, %v229
    %245 = vst.msk [vmem:[#allocation2 + $0xc8] sm:$0xff] %vm85, %v230
    %246 = vst.msk [vmem:[#allocation2 + $0xd8] sm:$0xff] %vm85, %v231
    %247 = vst.msk [vmem:[#allocation2 + $0xe8] sm:$0xff] %vm85, %v232
    %v248 = vld [vmem:[#allocation2] sm:$0xff]
    %v249 = vld [vmem:[#allocation2 + $0x8] sm:$0xff]
    %v250 = vld [vmem:[#allocation2 + $0x10] sm:$0xff]
    %v251 = vld [vmem:[#allocation2 + $0x18] sm:$0xff]
    %v252 = vld [vmem:[#allocation2 + $0x20] sm:$0xff]
    %v253 = vld [vmem:[#allocation2 + $0x28] sm:$0xff]
    %v254 = vld [vmem:[#allocation2 + $0x30] sm:$0xff]
    %v255 = vld [vmem:[#allocation2 + $0x38] sm:$0xff]
    %v256 = vld [vmem:[#allocation2 + $0x40] sm:$0xff]
    %v257 = vld [vmem:[#allocation2 + $0x48] sm:$0xff]
    %v258 = vld [vmem:[#allocation2 + $0x50] sm:$0xff]
    %v259 = vld [vmem:[#allocation2 + $0x58] sm:$0xff]
    %v260 = vld [vmem:[#allocation2 + $0x60] sm:$0xff]
    %v261 = vld [vmem:[#allocation2 + $0x68] sm:$0xff]
    %v262 = vld [vmem:[#allocation2 + $0x70] sm:$0xff]
    %v263 = vld [vmem:[#allocation2 + $0x78] sm:$0xff]
    %v264 = vld [vmem:[#allocation2 + $0x80] sm:$0xff]
    %v265 = vld [vmem:[#allocation2 + $0x88] sm:$0xff]
    %v266 = vld [vmem:[#allocation2 + $0x90] sm:$0xff]
    %v267 = vld [vmem:[#allocation2 + $0x98] sm:$0xff]
    %v268 = vld [vmem:[#allocation2 + $0xa0] sm:$0xff]
    %v269 = vld [vmem:[#allocation2 + $0xa8] sm:$0xff]
    %v270 = vld [vmem:[#allocation2 + $0xb0] sm:$0xff]
    %v271 = vld [vmem:[#allocation2 + $0xb8] sm:$0xff]
    %v272 = vld [vmem:[#allocation2 + $0xc0] sm:$0xff]
    %v273 = vld [vmem:[#allocation2 + $0xc8] sm:$0xff]
    %v274 = vld [vmem:[#allocation2 + $0xd0] sm:$0xff]
    %v275 = vld [vmem:[#allocation2 + $0xd8] sm:$0xff]
    %v276 = vld [vmem:[#allocation2 + $0xe0] sm:$0xff]
    %v277 = vld [vmem:[#allocation2 + $0xe8] sm:$0xff]
    %v278 = vld [vmem:[#allocation2 + $0xf0] sm:$0xff]
    %v279 = vld [vmem:[#allocation2 + $0xf8] sm:$0xff]
    %v280 = vld [vmem:[#allocation6] sm:$0xff]
    %v281 = vld [vmem:[#allocation6 + $0x8] sm:$0xff]
    %v282 = vld [vmem:[#allocation6 + $0x10] sm:$0xff]
    %v283 = vld [vmem:[#allocation6 + $0x18] sm:$0xff]
    %v284 = vld [vmem:[#allocation6 + $0x20] sm:$0xff]
    %v285 = vld [vmem:[#allocation6 + $0x28] sm:$0xff]
    %v286 = vld [vmem:[#allocation6 + $0x30] sm:$0xff]
    %v287 = vld [vmem:[#allocation6 + $0x38] sm:$0xff]
    %v288 = vld [vmem:[#allocation6 + $0x40] sm:$0xff]
    %v289 = vld [vmem:[#allocation6 + $0x48] sm:$0xff]
    %v290 = vld [vmem:[#allocation6 + $0x50] sm:$0xff]
    %v291 = vld [vmem:[#allocation6 + $0x58] sm:$0xff]
    %v292 = vld [vmem:[#allocation6 + $0x60] sm:$0xff]
    %v293 = vld [vmem:[#allocation6 + $0x68] sm:$0xff]
    %v294 = vld [vmem:[#allocation6 + $0x70] sm:$0xff]
    %v295 = vld [vmem:[#allocation6 + $0x78] sm:$0xff]
    %v296 = vld [vmem:[#allocation6 + $0x80] sm:$0xff]
    %v297 = vld [vmem:[#allocation6 + $0x88] sm:$0xff]
    %v298 = vld [vmem:[#allocation6 + $0x90] sm:$0xff]
    %v299 = vld [vmem:[#allocation6 + $0x98] sm:$0xff]
    %v300 = vld [vmem:[#allocation6 + $0xa0] sm:$0xff]
    %v301 = vld [vmem:[#allocation6 + $0xa8] sm:$0xff]
    %v302 = vld [vmem:[#allocation6 + $0xb0] sm:$0xff]
    %v303 = vld [vmem:[#allocation6 + $0xb8] sm:$0xff]
    %v304 = vld [vmem:[#allocation6 + $0xc0] sm:$0xff]
    %v305 = vld [vmem:[#allocation6 + $0xc8] sm:$0xff]
    %v306 = vld [vmem:[#allocation6 + $0xd0] sm:$0xff]
    %v307 = vld [vmem:[#allocation6 + $0xd8] sm:$0xff]
    %v308 = vld [vmem:[#allocation6 + $0xe0] sm:$0xff]
    %v309 = vld [vmem:[#allocation6 + $0xe8] sm:$0xff]
    %v310 = vld [vmem:[#allocation6 + $0xf0] sm:$0xff]
    %v311 = vld [vmem:[#allocation6 + $0xf8] sm:$0xff]
    %v312 = vld [vmem:[#allocation6 + $0x100] sm:$0xff]
    %v313 = vld [vmem:[#allocation6 + $0x108] sm:$0xff]
    %v314 = vld [vmem:[#allocation6 + $0x110] sm:$0xff]
    %v315 = vld [vmem:[#allocation6 + $0x118] sm:$0xff]
    %v316 = vld [vmem:[#allocation6 + $0x120] sm:$0xff]
    %v317 = vld [vmem:[#allocation6 + $0x128] sm:$0xff]
    %v318 = vld [vmem:[#allocation6 + $0x130] sm:$0xff]
    %v319 = vld [vmem:[#allocation6 + $0x138] sm:$0xff]
    %v320 = vld [vmem:[#allocation6 + $0x140] sm:$0xff]
    %v321 = vld [vmem:[#allocation6 + $0x148] sm:$0xff]
    %v322 = vld [vmem:[#allocation6 + $0x150] sm:$0xff]
    %v323 = vld [vmem:[#allocation6 + $0x158] sm:$0xff]
    %v324 = vld [vmem:[#allocation6 + $0x160] sm:$0xff]
    %v325 = vld [vmem:[#allocation6 + $0x168] sm:$0xff]
    %v326 = vld [vmem:[#allocation6 + $0x170] sm:$0xff]
    %v327 = vld [vmem:[#allocation6 + $0x178] sm:$0xff]
    %v328 = vld [vmem:[#allocation8] sm:$0x3]
    %v330 = vlaneseq
    %v331 = vshrl.u32 %v330, 7
    %v332 = vsub.s32 0, %v331
    %v333 = vrot.slane %v328, %v332
    %v334 = vlaneseq
    %v335 = vshrl.u32 %v334, 7
    %v336 = vsub.s32 1, %v335
    %v337 = vrot.slane %v328, %v336
    %v341 = vsel %vm85, %v249, 0
    %v344 = vsel %vm85, %v251, 0
    %v347 = vsel %vm85, %v253, 0
    %v350 = vsel %vm85, %v255, 0
    %v353 = vsel %vm85, %v257, 0
    %v356 = vsel %vm85, %v259, 0
    %v359 = vsel %vm85, %v261, 0
    %v362 = vsel %vm85, %v263, 0
    %v365 = vsel %vm85, %v265, 0
    %v368 = vsel %vm85, %v267, 0
    %v371 = vsel %vm85, %v269, 0
    %v374 = vsel %vm85, %v271, 0
    %v377 = vsel %vm85, %v273, 0
    %v380 = vsel %vm85, %v275, 0
    %v383 = vsel %vm85, %v277, 0
    %v386 = vsel %vm85, %v279, 0
    %388 = vmatprep.subr.mxu0 %v281
    %389 = vmatpush1.msra.mxu0 %v280
    %390 = vmatprep.subr.mxu0 %v283
    %391 = vmatpush1.msra.mxu0 %v282
    %392 = vmatprep.subr.mxu0 %v285
    %393 = vmatpush1.msra.mxu0 %v284
    %394 = vmatprep.subr.mxu0 %v287
    %395 = vmatpush1.msra.mxu0 %v286
    %396 = vmatprep.subr.mxu0 %v289
    %397 = vmatpush1.msra.mxu0 %v288
    %398 = vmatprep.subr.mxu0 %v291
    %399 = vmatpush1.msra.mxu0 %v290
    %400 = vmatprep.subr.mxu0 %v293
    %401 = vmatpush1.msra.mxu0 %v292
    %402 = vmatprep.subr.mxu0 %v295
    %403 = vmatpush1.msra.mxu0 %v294
    %404 = vmatprep.subr.mxu0 %v297
    %405 = vmatpush1.msra.mxu0 %v296
    %406 = vmatprep.subr.mxu0 %v299
    %407 = vmatpush1.msra.mxu0 %v298
    %408 = vmatprep.subr.mxu0 %v301
    %409 = vmatpush1.msra.mxu0 %v300
    %410 = vmatprep.subr.mxu0 %v303
    %411 = vmatpush1.msra.mxu0 %v302
    %412 = vmatprep.subr.mxu0 %v305
    %413 = vmatpush1.msra.mxu0 %v304
    %414 = vmatprep.subr.mxu0 %v307
    %415 = vmatpush1.msra.mxu0 %v306
    %416 = vmatprep.subr.mxu0 %v309
    %417 = vmatpush1.msra.mxu0 %v308
    %418 = vmatprep.subr.mxu0 %v311
    %419 = vmatpush1.msra.mxu0 %v310
    %420 = vmatprep.subr.mxu0 %v313
    %421 = vmatpush1.msra.mxu0 %v312
    %422 = vmatprep.subr.mxu0 %v315
    %423 = vmatpush1.msra.mxu0 %v314
    %424 = vmatprep.subr.mxu0 %v317
    %425 = vmatpush1.msra.mxu0 %v316
    %426 = vmatprep.subr.mxu0 %v319
    %427 = vmatpush1.msra.mxu0 %v318
    %428 = vmatprep.subr.mxu0 %v321
    %429 = vmatpush1.msra.mxu0 %v320
    %430 = vmatprep.subr.mxu0 %v323
    %431 = vmatpush1.msra.mxu0 %v322
    %432 = vmatprep.subr.mxu0 %v325
    %433 = vmatpush1.msra.mxu0 %v324
    %434 = vmatprep.subr.mxu0 %v327
    %435 = vmatpush1.msra.mxu0 %v326
    %436 = vmatprep.subr.mxu0 0.0
    %437 = vmatpush1.msra.mxu0 0.0
    %438 = vmatprep.subr.mxu0 0.0
    %439 = vmatpush1.msra.mxu0 0.0
    %440 = vmatprep.subr.mxu0 0.0
    %441 = vmatpush1.msra.mxu0 0.0
    %442 = vmatprep.subr.mxu0 0.0
    %443 = vmatpush1.msra.mxu0 0.0
    %444 = vmatprep.subr.mxu0 0.0
    %445 = vmatpush1.msra.mxu0 0.0
    %446 = vmatprep.subr.mxu0 0.0
    %447 = vmatpush1.msra.mxu0 0.0
    %448 = vmatprep.subr.mxu0 0.0
    %449 = vmatpush1.msra.mxu0 0.0
    %450 = vmatprep.subr.mxu0 0.0
    %451 = vmatpush1.msra.mxu0 0.0
    %452 = vmatprep.mubr.f32.mxu0 %v341
    %453 = vmatmul.mubr.f32.gmra.mrb[0].mxu0 %v248
    %v454 = vpop.f32.mrb[0].mxu0
    %v455 = vadd.f32 %v333, %v454
    %v456 = vpop.f32.mrb[0].mxu0
    %v457 = vadd.f32 %v337, %v456
    %458 = vmatprep.mubr.f32.mxu0 %v344
    %459 = vmatmul.mubr.f32.gmra.mrb[0].mxu0 %v250
    %v460 = vpop.f32.mrb[0].mxu0
    %v461 = vadd.f32 %v333, %v460
    %v462 = vpop.f32.mrb[0].mxu0
    %v463 = vadd.f32 %v337, %v462
    %464 = vmatprep.mubr.f32.mxu0 %v347
    %465 = vmatmul.mubr.f32.gmra.mrb[0].mxu0 %v252
    %v466 = vpop.f32.mrb[0].mxu0
    %v467 = vadd.f32 %v333, %v466
    %v468 = vpop.f32.mrb[0].mxu0
    %v469 = vadd.f32 %v337, %v468
    %470 = vmatprep.mubr.f32.mxu0 %v350
    %471 = vmatmul.mubr.f32.gmra.mrb[0].mxu0 %v254
    %v472 = vpop.f32.mrb[0].mxu0
    %v473 = vadd.f32 %v333, %v472
    %v474 = vpop.f32.mrb[0].mxu0
    %v475 = vadd.f32 %v337, %v474
    %476 = vmatprep.mubr.f32.mxu0 %v353
    %477 = vmatmul.mubr.f32.gmra.mrb[0].mxu0 %v256
    %v478 = vpop.f32.mrb[0].mxu0
    %v479 = vadd.f32 %v333, %v478
    %v480 = vpop.f32.mrb[0].mxu0
    %v481 = vadd.f32 %v337, %v480
    %482 = vmatprep.mubr.f32.mxu0 %v356
    %483 = vmatmul.mubr.f32.gmra.mrb[0].mxu0 %v258
    %v484 = vpop.f32.mrb[0].mxu0
    %v485 = vadd.f32 %v333, %v484
    %v486 = vpop.f32.mrb[0].mxu0
    %v487 = vadd.f32 %v337, %v486
    %488 = vmatprep.mubr.f32.mxu0 %v359
    %489 = vmatmul.mubr.f32.gmra.mrb[0].mxu0 %v260
    %v490 = vpop.f32.mrb[0].mxu0
    %v491 = vadd.f32 %v333, %v490
    %v492 = vpop.f32.mrb[0].mxu0
    %v493 = vadd.f32 %v337, %v492
    %494 = vmatprep.mubr.f32.mxu0 %v362
    %495 = vmatmul.mubr.f32.gmra.mrb[0].mxu0 %v262
    %v496 = vpop.f32.mrb[0].mxu0
    %v497 = vadd.f32 %v333, %v496
    %v498 = vpop.f32.mrb[0].mxu0
    %v499 = vadd.f32 %v337, %v498
    %500 = vmatprep.mubr.f32.mxu0 %v365
    %501 = vmatmul.mubr.f32.gmra.mrb[0].mxu0 %v264
    %v502 = vpop.f32.mrb[0].mxu0
    %v503 = vadd.f32 %v333, %v502
    %v504 = vpop.f32.mrb[0].mxu0
    %v505 = vadd.f32 %v337, %v504
    %506 = vmatprep.mubr.f32.mxu0 %v368
    %507 = vmatmul.mubr.f32.gmra.mrb[0].mxu0 %v266
    %v508 = vpop.f32.mrb[0].mxu0
    %v509 = vadd.f32 %v333, %v508
    %v510 = vpop.f32.mrb[0].mxu0
    %v511 = vadd.f32 %v337, %v510
    %512 = vmatprep.mubr.f32.mxu0 %v371
    %513 = vmatmul.mubr.f32.gmra.mrb[0].mxu0 %v268
    %v514 = vpop.f32.mrb[0].mxu0
    %v515 = vadd.f32 %v333, %v514
    %v516 = vpop.f32.mrb[0].mxu0
    %v517 = vadd.f32 %v337, %v516
    %518 = vmatprep.mubr.f32.mxu0 %v374
    %519 = vmatmul.mubr.f32.gmra.mrb[0].mxu0 %v270
    %v520 = vpop.f32.mrb[0].mxu0
    %v521 = vadd.f32 %v333, %v520
    %v522 = vpop.f32.mrb[0].mxu0
    %v523 = vadd.f32 %v337, %v522
    %524 = vmatprep.mubr.f32.mxu0 %v377
    %525 = vmatmul.mubr.f32.gmra.mrb[0].mxu0 %v272
    %v526 = vpop.f32.mrb[0].mxu0
    %v527 = vadd.f32 %v333, %v526
    %v528 = vpop.f32.mrb[0].mxu0
    %v529 = vadd.f32 %v337, %v528
    %530 = vmatprep.mubr.f32.mxu0 %v380
    %531 = vmatmul.mubr.f32.gmra.mrb[0].mxu0 %v274
    %v532 = vpop.f32.mrb[0].mxu0
    %v533 = vadd.f32 %v333, %v532
    %v534 = vpop.f32.mrb[0].mxu0
    %v535 = vadd.f32 %v337, %v534
    %536 = vmatprep.mubr.f32.mxu0 %v383
    %537 = vmatmul.mubr.f32.gmra.mrb[0].mxu0 %v276
    %v538 = vpop.f32.mrb[0].mxu0
    %v539 = vadd.f32 %v333, %v538
    %v540 = vpop.f32.mrb[0].mxu0
    %v541 = vadd.f32 %v337, %v540
    %542 = vmatprep.mubr.f32.mxu0 %v386
    %543 = vmatmul.mubr.f32.gmra.mrb[0].mxu0 %v278
    %v544 = vpop.f32.mrb[0].mxu0
    %v545 = vadd.f32 %v333, %v544
    %v546 = vpop.f32.mrb[0].mxu0
    %v547 = vadd.f32 %v337, %v546
    %548 = vdwg.mxu0
    %v549 = vmax.f32 %v455, 0.0
    %v550 = vmax.f32 %v457, 0.0
    %v551 = vmax.f32 %v461, 0.0
    %v552 = vmax.f32 %v463, 0.0
    %v553 = vmax.f32 %v467, 0.0
    %v554 = vmax.f32 %v469, 0.0
    %v555 = vmax.f32 %v473, 0.0
    %v556 = vmax.f32 %v475, 0.0
    %v557 = vmax.f32 %v479, 0.0
    %v558 = vmax.f32 %v481, 0.0
    %v559 = vmax.f32 %v485, 0.0
    %v560 = vmax.f32 %v487, 0.0
    %v561 = vmax.f32 %v491, 0.0
    %v562 = vmax.f32 %v493, 0.0
    %v563 = vmax.f32 %v497, 0.0
    %v564 = vmax.f32 %v499, 0.0
    %v565 = vmax.f32 %v503, 0.0
    %v566 = vmax.f32 %v505, 0.0
    %v567 = vmax.f32 %v509, 0.0
    %v568 = vmax.f32 %v511, 0.0
    %v569 = vmax.f32 %v515, 0.0
    %v570 = vmax.f32 %v517, 0.0
    %v571 = vmax.f32 %v521, 0.0
    %v572 = vmax.f32 %v523, 0.0
    %v573 = vmax.f32 %v527, 0.0
    %v574 = vmax.f32 %v529, 0.0
    %v575 = vmax.f32 %v533, 0.0
    %v576 = vmax.f32 %v535, 0.0
    %v577 = vmax.f32 %v539, 0.0
    %v578 = vmax.f32 %v541, 0.0
    %v579 = vmax.f32 %v545, 0.0
    %v580 = vmax.f32 %v547, 0.0
    %v581 = vld [vmem:[#allocation9] sm:$0xff]
    %v582 = vld [vmem:[#allocation9 + $0x8] sm:$0xff]
    %v583 = vld [vmem:[#allocation9 + $0x10] sm:$0xff]
    %v584 = vld [vmem:[#allocation9 + $0x18] sm:$0xff]
    %v585 = vld [vmem:[#allocation9 + $0x20] sm:$0xff]
    %v586 = vld [vmem:[#allocation9 + $0x28] sm:$0xff]
    %v587 = vld [vmem:[#allocation9 + $0x30] sm:$0xff]
    %v588 = vld [vmem:[#allocation9 + $0x38] sm:$0xff]
    %v589 = vld [vmem:[#allocation9 + $0x40] sm:$0xff]
    %v590 = vld [vmem:[#allocation9 + $0x48] sm:$0xff]
    %v591 = vld [vmem:[#allocation9 + $0x50] sm:$0xff]
    %v592 = vld [vmem:[#allocation9 + $0x58] sm:$0xff]
    %v593 = vld [vmem:[#allocation9 + $0x60] sm:$0xff]
    %v594 = vld [vmem:[#allocation9 + $0x68] sm:$0xff]
    %v595 = vld [vmem:[#allocation9 + $0x70] sm:$0xff]
    %v596 = vld [vmem:[#allocation9 + $0x78] sm:$0xff]
    %v597 = vld [vmem:[#allocation9 + $0x80] sm:$0xff]
    %v598 = vld [vmem:[#allocation9 + $0x88] sm:$0xff]
    %v599 = vld [vmem:[#allocation9 + $0x90] sm:$0xff]
    %v600 = vld [vmem:[#allocation9 + $0x98] sm:$0xff]
    %v601 = vld [vmem:[#allocation9 + $0xa0] sm:$0xff]
    %v602 = vld [vmem:[#allocation9 + $0xa8] sm:$0xff]
    %v603 = vld [vmem:[#allocation9 + $0xb0] sm:$0xff]
    %v604 = vld [vmem:[#allocation9 + $0xb8] sm:$0xff]
    %v605 = vld [vmem:[#allocation9 + $0xc0] sm:$0xff]
    %v606 = vld [vmem:[#allocation9 + $0xc8] sm:$0xff]
    %v607 = vld [vmem:[#allocation9 + $0xd0] sm:$0xff]
    %v608 = vld [vmem:[#allocation9 + $0xd8] sm:$0xff]
    %v609 = vld [vmem:[#allocation9 + $0xe0] sm:$0xff]
    %v610 = vld [vmem:[#allocation9 + $0xe8] sm:$0xff]
    %v611 = vld [vmem:[#allocation9 + $0xf0] sm:$0xff]
    %v612 = vld [vmem:[#allocation9 + $0xf8] sm:$0xff]
    %v613 = vld [vmem:[#allocation9 + $0x100] sm:$0xff]
    %v614 = vld [vmem:[#allocation9 + $0x108] sm:$0xff]
    %v615 = vld [vmem:[#allocation9 + $0x110] sm:$0xff]
    %v616 = vld [vmem:[#allocation9 + $0x118] sm:$0xff]
    %v617 = vld [vmem:[#allocation9 + $0x120] sm:$0xff]
    %v618 = vld [vmem:[#allocation9 + $0x128] sm:$0xff]
    %v619 = vld [vmem:[#allocation9 + $0x130] sm:$0xff]
    %v620 = vld [vmem:[#allocation9 + $0x138] sm:$0xff]
    %v621 = vld [vmem:[#allocation9 + $0x140] sm:$0xff]
    %v622 = vld [vmem:[#allocation9 + $0x148] sm:$0xff]
    %v623 = vld [vmem:[#allocation9 + $0x150] sm:$0xff]
    %v624 = vld [vmem:[#allocation9 + $0x158] sm:$0xff]
    %v625 = vld [vmem:[#allocation9 + $0x160] sm:$0xff]
    %v626 = vld [vmem:[#allocation9 + $0x168] sm:$0xff]
    %v627 = vld [vmem:[#allocation9 + $0x170] sm:$0xff]
    %v628 = vld [vmem:[#allocation9 + $0x178] sm:$0xff]
    %v629 = vld [vmem:[#allocation9 + $0x180] sm:$0xff]
    %v630 = vld [vmem:[#allocation9 + $0x188] sm:$0xff]
    %v631 = vld [vmem:[#allocation9 + $0x190] sm:$0xff]
    %v632 = vld [vmem:[#allocation9 + $0x198] sm:$0xff]
    %v633 = vld [vmem:[#allocation9 + $0x1a0] sm:$0xff]
    %v634 = vld [vmem:[#allocation9 + $0x1a8] sm:$0xff]
    %v635 = vld [vmem:[#allocation9 + $0x1b0] sm:$0xff]
    %v636 = vld [vmem:[#allocation9 + $0x1b8] sm:$0xff]
    %v637 = vld [vmem:[#allocation9 + $0x1c0] sm:$0xff]
    %v638 = vld [vmem:[#allocation9 + $0x1c8] sm:$0xff]
    %v639 = vld [vmem:[#allocation9 + $0x1d0] sm:$0xff]
    %v640 = vld [vmem:[#allocation9 + $0x1d8] sm:$0xff]
    %v641 = vld [vmem:[#allocation9 + $0x1e0] sm:$0xff]
    %v642 = vld [vmem:[#allocation9 + $0x1e8] sm:$0xff]
    %v643 = vld [vmem:[#allocation9 + $0x1f0] sm:$0xff]
    %v644 = vld [vmem:[#allocation9 + $0x1f8] sm:$0xff]
    %645 = vmatprep.subr.mxu0 0.0
    %646 = vmatpush1.msra.mxu0 %v613
    %647 = vmatprep.subr.mxu0 0.0
    %648 = vmatpush1.msra.mxu0 %v614
    %649 = vmatprep.subr.mxu0 0.0
    %650 = vmatpush1.msra.mxu0 %v615
    %651 = vmatprep.subr.mxu0 0.0
    %652 = vmatpush1.msra.mxu0 %v616
    %653 = vmatprep.subr.mxu0 0.0
    %654 = vmatpush1.msra.mxu0 %v617
    %655 = vmatprep.subr.mxu0 0.0
    %656 = vmatpush1.msra.mxu0 %v618
    %657 = vmatprep.subr.mxu0 0.0
    %658 = vmatpush1.msra.mxu0 %v619
    %659 = vmatprep.subr.mxu0 0.0
    %660 = vmatpush1.msra.mxu0 %v620
    %661 = vmatprep.subr.mxu0 0.0
    %662 = vmatpush1.msra.mxu0 %v621
    %663 = vmatprep.subr.mxu0 0.0
    %664 = vmatpush1.msra.mxu0 %v622
    %665 = vmatprep.subr.mxu0 0.0
    %666 = vmatpush1.msra.mxu0 %v623
    %667 = vmatprep.subr.mxu0 0.0
    %668 = vmatpush1.msra.mxu0 %v624
    %669 = vmatprep.subr.mxu0 0.0
    %670 = vmatpush1.msra.mxu0 %v625
    %671 = vmatprep.subr.mxu0 0.0
    %672 = vmatpush1.msra.mxu0 %v626
    %673 = vmatprep.subr.mxu0 0.0
    %674 = vmatpush1.msra.mxu0 %v627
    %675 = vmatprep.subr.mxu0 0.0
    %676 = vmatpush1.msra.mxu0 %v628
    %677 = vmatprep.subr.mxu0 0.0
    %678 = vmatpush1.msra.mxu0 %v629
    %679 = vmatprep.subr.mxu0 0.0
    %680 = vmatpush1.msra.mxu0 %v630
    %681 = vmatprep.subr.mxu0 0.0
    %682 = vmatpush1.msra.mxu0 %v631
    %683 = vmatprep.subr.mxu0 0.0
    %684 = vmatpush1.msra.mxu0 %v632
    %685 = vmatprep.subr.mxu0 0.0
    %686 = vmatpush1.msra.mxu0 %v633
    %687 = vmatprep.subr.mxu0 0.0
    %688 = vmatpush1.msra.mxu0 %v634
    %689 = vmatprep.subr.mxu0 0.0
    %690 = vmatpush1.msra.mxu0 %v635
    %691 = vmatprep.subr.mxu0 0.0
    %692 = vmatpush1.msra.mxu0 %v636
    %693 = vmatprep.subr.mxu0 0.0
    %694 = vmatpush1.msra.mxu0 %v637
    %695 = vmatprep.subr.mxu0 0.0
    %696 = vmatpush1.msra.mxu0 %v638
    %697 = vmatprep.subr.mxu0 0.0
    %698 = vmatpush1.msra.mxu0 %v639
    %699 = vmatprep.subr.mxu0 0.0
    %700 = vmatpush1.msra.mxu0 %v640
    %701 = vmatprep.subr.mxu0 0.0
    %702 = vmatpush1.msra.mxu0 %v641
    %703 = vmatprep.subr.mxu0 0.0
    %704 = vmatpush1.msra.mxu0 %v642
    %705 = vmatprep.subr.mxu0 0.0
    %706 = vmatpush1.msra.mxu0 %v643
    %707 = vmatprep.subr.mxu0 0.0
    %708 = vmatpush1.msra.mxu0 %v644
    %709 = vmatprep.mubr.f32.mxu0 %v552
    %710 = vmatmul.mubr.f32.gmra.mrb[0].mxu0 %v551
    %v711 = vpop.f32.mrb[0].mxu0
    %v712 = vadd.f32 0.0, %v711
    %v713 = vpop.f32.mrb[0].mxu0
    %714 = vdwg.mxu0
    %715 = vmatprep.subr.mxu0 0.0
    %716 = vmatpush1.msra.mxu0 %v581
    %717 = vmatprep.subr.mxu0 0.0
    %718 = vmatpush1.msra.mxu0 %v582
    %719 = vmatprep.subr.mxu0 0.0
    %720 = vmatpush1.msra.mxu0 %v583
    %721 = vmatprep.subr.mxu0 0.0
    %722 = vmatpush1.msra.mxu0 %v584
    %723 = vmatprep.subr.mxu0 0.0
    %724 = vmatpush1.msra.mxu0 %v585
    %725 = vmatprep.subr.mxu0 0.0
    %726 = vmatpush1.msra.mxu0 %v586
    %727 = vmatprep.subr.mxu0 0.0
    %728 = vmatpush1.msra.mxu0 %v587
    %729 = vmatprep.subr.mxu0 0.0
    %730 = vmatpush1.msra.mxu0 %v588
    %731 = vmatprep.subr.mxu0 0.0
    %732 = vmatpush1.msra.mxu0 %v589
    %733 = vmatprep.subr.mxu0 0.0
    %734 = vmatpush1.msra.mxu0 %v590
    %735 = vmatprep.subr.mxu0 0.0
    %736 = vmatpush1.msra.mxu0 %v591
    %737 = vmatprep.subr.mxu0 0.0
    %738 = vmatpush1.msra.mxu0 %v592
    %739 = vmatprep.subr.mxu0 0.0
    %740 = vmatpush1.msra.mxu0 %v593
    %741 = vmatprep.subr.mxu0 0.0
    %742 = vmatpush1.msra.mxu0 %v594
    %743 = vmatprep.subr.mxu0 0.0
    %744 = vmatpush1.msra.mxu0 %v595
    %745 = vmatprep.subr.mxu0 0.0
    %746 = vmatpush1.msra.mxu0 %v596
    %747 = vmatprep.subr.mxu0 0.0
    %748 = vmatpush1.msra.mxu0 %v597
    %749 = vmatprep.subr.mxu0 0.0
    %750 = vmatpush1.msra.mxu0 %v598
    %751 = vmatprep.subr.mxu0 0.0
    %752 = vmatpush1.msra.mxu0 %v599
    %753 = vmatprep.subr.mxu0 0.0
    %754 = vmatpush1.msra.mxu0 %v600
    %755 = vmatprep.subr.mxu0 0.0
    %756 = vmatpush1.msra.mxu0 %v601
    %757 = vmatprep.subr.mxu0 0.0
    %758 = vmatpush1.msra.mxu0 %v602
    %759 = vmatprep.subr.mxu0 0.0
    %760 = vmatpush1.msra.mxu0 %v603
    %761 = vmatprep.subr.mxu0 0.0
    %762 = vmatpush1.msra.mxu0 %v604
    %763 = vmatprep.subr.mxu0 0.0
    %764 = vmatpush1.msra.mxu0 %v605
    %765 = vmatprep.subr.mxu0 0.0
    %766 = vmatpush1.msra.mxu0 %v606
    %767 = vmatprep.subr.mxu0 0.0
    %768 = vmatpush1.msra.mxu0 %v607
    %769 = vmatprep.subr.mxu0 0.0
    %770 = vmatpush1.msra.mxu0 %v608
    %771 = vmatprep.subr.mxu0 0.0
    %772 = vmatpush1.msra.mxu0 %v609
    %773 = vmatprep.subr.mxu0 0.0
    %774 = vmatpush1.msra.mxu0 %v610
    %775 = vmatprep.subr.mxu0 0.0
    %776 = vmatpush1.msra.mxu0 %v611
    %777 = vmatprep.subr.mxu0 0.0
    %778 = vmatpush1.msra.mxu0 %v612
    %779 = vmatprep.mubr.f32.mxu0 %v550
    %780 = vmatmul.mubr.f32.gmra.mrb[0].mxu0 %v549
    %v781 = vpop.f32.mrb[0].mxu0
    %v782 = vadd.f32 %v712, %v781
    %v783 = vpop.f32.mrb[0].mxu0
    %784 = vdwg.mxu0
    %v785 = vld [vmem:[#allocation9 + $0x200] sm:$0xff]
    %v786 = vld [vmem:[#allocation9 + $0x208] sm:$0xff]
    %v787 = vld [vmem:[#allocation9 + $0x210] sm:$0xff]
    %v788 = vld [vmem:[#allocation9 + $0x218] sm:$0xff]
    %v789 = vld [vmem:[#allocation9 + $0x220] sm:$0xff]
    %v790 = vld [vmem:[#allocation9 + $0x228] sm:$0xff]
    %v791 = vld [vmem:[#allocation9 + $0x230] sm:$0xff]
    %v792 = vld [vmem:[#allocation9 + $0x238] sm:$0xff]
    %v793 = vld [vmem:[#allocation9 + $0x240] sm:$0xff]
    %v794 = vld [vmem:[#allocation9 + $0x248] sm:$0xff]
    %v795 = vld [vmem:[#allocation9 + $0x250] sm:$0xff]
    %v796 = vld [vmem:[#allocation9 + $0x258] sm:$0xff]
    %v797 = vld [vmem:[#allocation9 + $0x260] sm:$0xff]
    %v798 = vld [vmem:[#allocation9 + $0x268] sm:$0xff]
    %v799 = vld [vmem:[#allocation9 + $0x270] sm:$0xff]
    %v800 = vld [vmem:[#allocation9 + $0x278] sm:$0xff]
    %v801 = vld [vmem:[#allocation9 + $0x280] sm:$0xff]
    %v802 = vld [vmem:[#allocation9 + $0x288] sm:$0xff]
    %v803 = vld [vmem:[#allocation9 + $0x290] sm:$0xff]
    %v804 = vld [vmem:[#allocation9 + $0x298] sm:$0xff]
    %v805 = vld [vmem:[#allocation9 + $0x2a0] sm:$0xff]
    %v806 = vld [vmem:[#allocation9 + $0x2a8] sm:$0xff]
    %v807 = vld [vmem:[#allocation9 + $0x2b0] sm:$0xff]
    %v808 = vld [vmem:[#allocation9 + $0x2b8] sm:$0xff]
    %v809 = vld [vmem:[#allocation9 + $0x2c0] sm:$0xff]
    %v810 = vld [vmem:[#allocation9 + $0x2c8] sm:$0xff]
    %v811 = vld [vmem:[#allocation9 + $0x2d0] sm:$0xff]
    %v812 = vld [vmem:[#allocation9 + $0x2d8] sm:$0xff]
    %v813 = vld [vmem:[#allocation9 + $0x2e0] sm:$0xff]
    %v814 = vld [vmem:[#allocation9 + $0x2e8] sm:$0xff]
    %v815 = vld [vmem:[#allocation9 + $0x2f0] sm:$0xff]
    %v816 = vld [vmem:[#allocation9 + $0x2f8] sm:$0xff]
    %817 = vmatprep.subr.mxu0 0.0
    %818 = vmatpush1.msra.mxu0 %v785
    %819 = vmatprep.subr.mxu0 0.0
    %820 = vmatpush1.msra.mxu0 %v786
    %821 = vmatprep.subr.mxu0 0.0
    %822 = vmatpush1.msra.mxu0 %v787
    %823 = vmatprep.subr.mxu0 0.0
    %824 = vmatpush1.msra.mxu0 %v788
    %825 = vmatprep.subr.mxu0 0.0
    %826 = vmatpush1.msra.mxu0 %v789
    %827 = vmatprep.subr.mxu0 0.0
    %828 = vmatpush1.msra.mxu0 %v790
    %829 = vmatprep.subr.mxu0 0.0
    %830 = vmatpush1.msra.mxu0 %v791
    %831 = vmatprep.subr.mxu0 0.0
    %832 = vmatpush1.msra.mxu0 %v792
    %833 = vmatprep.subr.mxu0 0.0
    %834 = vmatpush1.msra.mxu0 %v793
    %835 = vmatprep.subr.mxu0 0.0
    %836 = vmatpush1.msra.mxu0 %v794
    %837 = vmatprep.subr.mxu0 0.0
    %838 = vmatpush1.msra.mxu0 %v795
    %839 = vmatprep.subr.mxu0 0.0
    %840 = vmatpush1.msra.mxu0 %v796
    %841 = vmatprep.subr.mxu0 0.0
    %842 = vmatpush1.msra.mxu0 %v797
    %843 = vmatprep.subr.mxu0 0.0
    %844 = vmatpush1.msra.mxu0 %v798
    %845 = vmatprep.subr.mxu0 0.0
    %846 = vmatpush1.msra.mxu0 %v799
    %847 = vmatprep.subr.mxu0 0.0
    %848 = vmatpush1.msra.mxu0 %v800
    %849 = vmatprep.subr.mxu0 0.0
    %850 = vmatpush1.msra.mxu0 %v801
    %851 = vmatprep.subr.mxu0 0.0
    %852 = vmatpush1.msra.mxu0 %v802
    %853 = vmatprep.subr.mxu0 0.0
    %854 = vmatpush1.msra.mxu0 %v803
    %855 = vmatprep.subr.mxu0 0.0
    %856 = vmatpush1.msra.mxu0 %v804
    %857 = vmatprep.subr.mxu0 0.0
    %858 = vmatpush1.msra.mxu0 %v805
    %859 = vmatprep.subr.mxu0 0.0
    %860 = vmatpush1.msra.mxu0 %v806
    %861 = vmatprep.subr.mxu0 0.0
    %862 = vmatpush1.msra.mxu0 %v807
    %863 = vmatprep.subr.mxu0 0.0
    %864 = vmatpush1.msra.mxu0 %v808
    %865 = vmatprep.subr.mxu0 0.0
    %866 = vmatpush1.msra.mxu0 %v809
    %867 = vmatprep.subr.mxu0 0.0
    %868 = vmatpush1.msra.mxu0 %v810
    %869 = vmatprep.subr.mxu0 0.0
    %870 = vmatpush1.msra.mxu0 %v811
    %871 = vmatprep.subr.mxu0 0.0
    %872 = vmatpush1.msra.mxu0 %v812
    %873 = vmatprep.subr.mxu0 0.0
    %874 = vmatpush1.msra.mxu0 %v813
    %875 = vmatprep.subr.mxu0 0.0
    %876 = vmatpush1.msra.mxu0 %v814
    %877 = vmatprep.subr.mxu0 0.0
    %878 = vmatpush1.msra.mxu0 %v815
    %879 = vmatprep.subr.mxu0 0.0
    %880 = vmatpush1.msra.mxu0 %v816
    %881 = vmatprep.mubr.f32.mxu0 %v554
    %882 = vmatmul.mubr.f32.gmra.mrb[0].mxu0 %v553
    %v883 = vpop.f32.mrb[0].mxu0
    %v884 = vadd.f32 0.0, %v883
    %v885 = vpop.f32.mrb[0].mxu0
    %886 = vdwg.mxu0
    %v887 = vadd.f32 %v782, %v884
    %v888 = vld [vmem:[#allocation9 + $0x300] sm:$0xff]
    %v889 = vld [vmem:[#allocation9 + $0x308] sm:$0xff]
    %v890 = vld [vmem:[#allocation9 + $0x310] sm:$0xff]
    %v891 = vld [vmem:[#allocation9 + $0x318] sm:$0xff]
    %v892 = vld [vmem:[#allocation9 + $0x320] sm:$0xff]
    %v893 = vld [vmem:[#allocation9 + $0x328] sm:$0xff]
    %v894 = vld [vmem:[#allocation9 + $0x330] sm:$0xff]
    %v895 = vld [vmem:[#allocation9 + $0x338] sm:$0xff]
    %v896 = vld [vmem:[#allocation9 + $0x340] sm:$0xff]
    %v897 = vld [vmem:[#allocation9 + $0x348] sm:$0xff]
    %v898 = vld [vmem:[#allocation9 + $0x350] sm:$0xff]
    %v899 = vld [vmem:[#allocation9 + $0x358] sm:$0xff]
    %v900 = vld [vmem:[#allocation9 + $0x360] sm:$0xff]
    %v901 = vld [vmem:[#allocation9 + $0x368] sm:$0xff]
    %v902 = vld [vmem:[#allocation9 + $0x370] sm:$0xff]
    %v903 = vld [vmem:[#allocation9 + $0x378] sm:$0xff]
    %v904 = vld [vmem:[#allocation9 + $0x380] sm:$0xff]
    %v905 = vld [vmem:[#allocation9 + $0x388] sm:$0xff]
    %v906 = vld [vmem:[#allocation9 + $0x390] sm:$0xff]
    %v907 = vld [vmem:[#allocation9 + $0x398] sm:$0xff]
    %v908 = vld [vmem:[#allocation9 + $0x3a0] sm:$0xff]
    %v909 = vld [vmem:[#allocation9 + $0x3a8] sm:$0xff]
    %v910 = vld [vmem:[#allocation9 + $0x3b0] sm:$0xff]
    %v911 = vld [vmem:[#allocation9 + $0x3b8] sm:$0xff]
    %v912 = vld [vmem:[#allocation9 + $0x3c0] sm:$0xff]
    %v913 = vld [vmem:[#allocation9 + $0x3c8] sm:$0xff]
    %v914 = vld [vmem:[#allocation9 + $0x3d0] sm:$0xff]
    %v915 = vld [vmem:[#allocation9 + $0x3d8] sm:$0xff]
    %v916 = vld [vmem:[#allocation9 + $0x3e0] sm:$0xff]
    %v917 = vld [vmem:[#allocation9 + $0x3e8] sm:$0xff]
    %v918 = vld [vmem:[#allocation9 + $0x3f0] sm:$0xff]
    %v919 = vld [vmem:[#allocation9 + $0x3f8] sm:$0xff]
    %920 = vmatprep.subr.mxu0 0.0
    %921 = vmatpush1.msra.mxu0 %v888
    %922 = vmatprep.subr.mxu0 0.0
    %923 = vmatpush1.msra.mxu0 %v889
    %924 = vmatprep.subr.mxu0 0.0
    %925 = vmatpush1.msra.mxu0 %v890
    %926 = vmatprep.subr.mxu0 0.0
    %927 = vmatpush1.msra.mxu0 %v891
    %928 = vmatprep.subr.mxu0 0.0
    %929 = vmatpush1.msra.mxu0 %v892
    %930 = vmatprep.subr.mxu0 0.0
    %931 = vmatpush1.msra.mxu0 %v893
    %932 = vmatprep.subr.mxu0 0.0
    %933 = vmatpush1.msra.mxu0 %v894
    %934 = vmatprep.subr.mxu0 0.0
    %935 = vmatpush1.msra.mxu0 %v895
    %936 = vmatprep.subr.mxu0 0.0
    %937 = vmatpush1.msra.mxu0 %v896
    %938 = vmatprep.subr.mxu0 0.0
    %939 = vmatpush1.msra.mxu0 %v897
    %940 = vmatprep.subr.mxu0 0.0
    %941 = vmatpush1.msra.mxu0 %v898
    %942 = vmatprep.subr.mxu0 0.0
    %943 = vmatpush1.msra.mxu0 %v899
    %944 = vmatprep.subr.mxu0 0.0
    %945 = vmatpush1.msra.mxu0 %v900
    %946 = vmatprep.subr.mxu0 0.0
    %947 = vmatpush1.msra.mxu0 %v901
    %948 = vmatprep.subr.mxu0 0.0
    %949 = vmatpush1.msra.mxu0 %v902
    %950 = vmatprep.subr.mxu0 0.0
    %951 = vmatpush1.msra.mxu0 %v903
    %952 = vmatprep.subr.mxu0 0.0
    %953 = vmatpush1.msra.mxu0 %v904
    %954 = vmatprep.subr.mxu0 0.0
    %955 = vmatpush1.msra.mxu0 %v905
    %956 = vmatprep.subr.mxu0 0.0
    %957 = vmatpush1.msra.mxu0 %v906
    %958 = vmatprep.subr.mxu0 0.0
    %959 = vmatpush1.msra.mxu0 %v907
    %960 = vmatprep.subr.mxu0 0.0
    %961 = vmatpush1.msra.mxu0 %v908
    %962 = vmatprep.subr.mxu0 0.0
    %963 = vmatpush1.msra.mxu0 %v909
    %964 = vmatprep.subr.mxu0 0.0
    %965 = vmatpush1.msra.mxu0 %v910
    %966 = vmatprep.subr.mxu0 0.0
    %967 = vmatpush1.msra.mxu0 %v911
    %968 = vmatprep.subr.mxu0 0.0
    %969 = vmatpush1.msra.mxu0 %v912
    %970 = vmatprep.subr.mxu0 0.0
    %971 = vmatpush1.msra.mxu0 %v913
    %972 = vmatprep.subr.mxu0 0.0
    %973 = vmatpush1.msra.mxu0 %v914
    %974 = vmatprep.subr.mxu0 0.0
    %975 = vmatpush1.msra.mxu0 %v915
    %976 = vmatprep.subr.mxu0 0.0
    %977 = vmatpush1.msra.mxu0 %v916
    %978 = vmatprep.subr.mxu0 0.0
    %979 = vmatpush1.msra.mxu0 %v917
    %980 = vmatprep.subr.mxu0 0.0
    %981 = vmatpush1.msra.mxu0 %v918
    %982 = vmatprep.subr.mxu0 0.0
    %983 = vmatpush1.msra.mxu0 %v919
    %984 = vmatprep.mubr.f32.mxu0 %v556
    %985 = vmatmul.mubr.f32.gmra.mrb[0].mxu0 %v555
    %v986 = vpop.f32.mrb[0].mxu0
    %v987 = vadd.f32 0.0, %v986
    %v988 = vpop.f32.mrb[0].mxu0
    %989 = vdwg.mxu0
    %v990 = vadd.f32 %v887, %v987
    %v991 = vld [vmem:[#allocation9 + $0x400] sm:$0xff]
    %v992 = vld [vmem:[#allocation9 + $0x408] sm:$0xff]
    %v993 = vld [vmem:[#allocation9 + $0x410] sm:$0xff]
    %v994 = vld [vmem:[#allocation9 + $0x418] sm:$0xff]
    %v995 = vld [vmem:[#allocation9 + $0x420] sm:$0xff]
    %v996 = vld [vmem:[#allocation9 + $0x428] sm:$0xff]
    %v997 = vld [vmem:[#allocation9 + $0x430] sm:$0xff]
    %v998 = vld [vmem:[#allocation9 + $0x438] sm:$0xff]
    %v999 = vld [vmem:[#allocation9 + $0x440] sm:$0xff]
    %v1000 = vld [vmem:[#allocation9 + $0x448] sm:$0xff]
    %v1001 = vld [vmem:[#allocation9 + $0x450] sm:$0xff]
    %v1002 = vld [vmem:[#allocation9 + $0x458] sm:$0xff]
    %v1003 = vld [vmem:[#allocation9 + $0x460] sm:$0xff]
    %v1004 = vld [vmem:[#allocation9 + $0x468] sm:$0xff]
    %v1005 = vld [vmem:[#allocation9 + $0x470] sm:$0xff]
    %v1006 = vld [vmem:[#allocation9 + $0x478] sm:$0xff]
    %v1007 = vld [vmem:[#allocation9 + $0x480] sm:$0xff]
    %v1008 = vld [vmem:[#allocation9 + $0x488] sm:$0xff]
    %v1009 = vld [vmem:[#allocation9 + $0x490] sm:$0xff]
    %v1010 = vld [vmem:[#allocation9 + $0x498] sm:$0xff]
    %v1011 = vld [vmem:[#allocation9 + $0x4a0] sm:$0xff]
    %v1012 = vld [vmem:[#allocation9 + $0x4a8] sm:$0xff]
    %v1013 = vld [vmem:[#allocation9 + $0x4b0] sm:$0xff]
    %v1014 = vld [vmem:[#allocation9 + $0x4b8] sm:$0xff]
    %v1015 = vld [vmem:[#allocation9 + $0x4c0] sm:$0xff]
    %v1016 = vld [vmem:[#allocation9 + $0x4c8] sm:$0xff]
    %v1017 = vld [vmem:[#allocation9 + $0x4d0] sm:$0xff]
    %v1018 = vld [vmem:[#allocation9 + $0x4d8] sm:$0xff]
    %v1019 = vld [vmem:[#allocation9 + $0x4e0] sm:$0xff]
    %v1020 = vld [vmem:[#allocation9 + $0x4e8] sm:$0xff]
    %v1021 = vld [vmem:[#allocation9 + $0x4f0] sm:$0xff]
    %v1022 = vld [vmem:[#allocation9 + $0x4f8] sm:$0xff]
    %1023 = vmatprep.subr.mxu0 0.0
    %1024 = vmatpush1.msra.mxu0 %v991
    %1025 = vmatprep.subr.mxu0 0.0
    %1026 = vmatpush1.msra.mxu0 %v992
    %1027 = vmatprep.subr.mxu0 0.0
    %1028 = vmatpush1.msra.mxu0 %v993
    %1029 = vmatprep.subr.mxu0 0.0
    %1030 = vmatpush1.msra.mxu0 %v994
    %1031 = vmatprep.subr.mxu0 0.0
    %1032 = vmatpush1.msra.mxu0 %v995
    %1033 = vmatprep.subr.mxu0 0.0
    %1034 = vmatpush1.msra.mxu0 %v996
    %1035 = vmatprep.subr.mxu0 0.0
    %1036 = vmatpush1.msra.mxu0 %v997
    %1037 = vmatprep.subr.mxu0 0.0
    %1038 = vmatpush1.msra.mxu0 %v998
    %1039 = vmatprep.subr.mxu0 0.0
    %1040 = vmatpush1.msra.mxu0 %v999
    %1041 = vmatprep.subr.mxu0 0.0
    %1042 = vmatpush1.msra.mxu0 %v1000
    %1043 = vmatprep.subr.mxu0 0.0
    %1044 = vmatpush1.msra.mxu0 %v1001
    %1045 = vmatprep.subr.mxu0 0.0
    %1046 = vmatpush1.msra.mxu0 %v1002
    %1047 = vmatprep.subr.mxu0 0.0
    %1048 = vmatpush1.msra.mxu0 %v1003
    %1049 = vmatprep.subr.mxu0 0.0
    %1050 = vmatpush1.msra.mxu0 %v1004
    %1051 = vmatprep.subr.mxu0 0.0
    %1052 = vmatpush1.msra.mxu0 %v1005
    %1053 = vmatprep.subr.mxu0 0.0
    %1054 = vmatpush1.msra.mxu0 %v1006
    %1055 = vmatprep.subr.mxu0 0.0
    %1056 = vmatpush1.msra.mxu0 %v1007
    %1057 = vmatprep.subr.mxu0 0.0
    %1058 = vmatpush1.msra.mxu0 %v1008
    %1059 = vmatprep.subr.mxu0 0.0
    %1060 = vmatpush1.msra.mxu0 %v1009
    %1061 = vmatprep.subr.mxu0 0.0
    %1062 = vmatpush1.msra.mxu0 %v1010
    %1063 = vmatprep.subr.mxu0 0.0
    %1064 = vmatpush1.msra.mxu0 %v1011
    %1065 = vmatprep.subr.mxu0 0.0
    %1066 = vmatpush1.msra.mxu0 %v1012
    %1067 = vmatprep.subr.mxu0 0.0
    %1068 = vmatpush1.msra.mxu0 %v1013
    %1069 = vmatprep.subr.mxu0 0.0
    %1070 = vmatpush1.msra.mxu0 %v1014
    %1071 = vmatprep.subr.mxu0 0.0
    %1072 = vmatpush1.msra.mxu0 %v1015
    %1073 = vmatprep.subr.mxu0 0.0
    %1074 = vmatpush1.msra.mxu0 %v1016
    %1075 = vmatprep.subr.mxu0 0.0
    %1076 = vmatpush1.msra.mxu0 %v1017
    %1077 = vmatprep.subr.mxu0 0.0
    %1078 = vmatpush1.msra.mxu0 %v1018
    %1079 = vmatprep.subr.mxu0 0.0
    %1080 = vmatpush1.msra.mxu0 %v1019
    %1081 = vmatprep.subr.mxu0 0.0
    %1082 = vmatpush1.msra.mxu0 %v1020
    %1083 = vmatprep.subr.mxu0 0.0
    %1084 = vmatpush1.msra.mxu0 %v1021
    %1085 = vmatprep.subr.mxu0 0.0
    %1086 = vmatpush1.msra.mxu0 %v1022
    %1087 = vmatprep.mubr.f32.mxu0 %v558
    %1088 = vmatmul.mubr.f32.gmra.mrb[0].mxu0 %v557
    %v1089 = vpop.f32.mrb[0].mxu0
    %v1090 = vadd.f32 0.0, %v1089
    %v1091 = vpop.f32.mrb[0].mxu0
    %1092 = vdwg.mxu0
    %v1093 = vadd.f32 %v990, %v1090
    %v1094 = vld [vmem:[#allocation9 + $0x500] sm:$0xff]
    %v1095 = vld [vmem:[#allocation9 + $0x508] sm:$0xff]
    %v1096 = vld [vmem:[#allocation9 + $0x510] sm:$0xff]
    %v1097 = vld [vmem:[#allocation9 + $0x518] sm:$0xff]
    %v1098 = vld [vmem:[#allocation9 + $0x520] sm:$0xff]
    %v1099 = vld [vmem:[#allocation9 + $0x528] sm:$0xff]
    %v1100 = vld [vmem:[#allocation9 + $0x530] sm:$0xff]
    %v1101 = vld [vmem:[#allocation9 + $0x538] sm:$0xff]
    %v1102 = vld [vmem:[#allocation9 + $0x540] sm:$0xff]
    %v1103 = vld [vmem:[#allocation9 + $0x548] sm:$0xff]
    %v1104 = vld [vmem:[#allocation9 + $0x550] sm:$0xff]
    %v1105 = vld [vmem:[#allocation9 + $0x558] sm:$0xff]
    %v1106 = vld [vmem:[#allocation9 + $0x560] sm:$0xff]
    %v1107 = vld [vmem:[#allocation9 + $0x568] sm:$0xff]
    %v1108 = vld [vmem:[#allocation9 + $0x570] sm:$0xff]
    %v1109 = vld [vmem:[#allocation9 + $0x578] sm:$0xff]
    %v1110 = vld [vmem:[#allocation9 + $0x580] sm:$0xff]
    %v1111 = vld [vmem:[#allocation9 + $0x588] sm:$0xff]
    %v1112 = vld [vmem:[#allocation9 + $0x590] sm:$0xff]
    %v1113 = vld [vmem:[#allocation9 + $0x598] sm:$0xff]
    %v1114 = vld [vmem:[#allocation9 + $0x5a0] sm:$0xff]
    %v1115 = vld [vmem:[#allocation9 + $0x5a8] sm:$0xff]
    %v1116 = vld [vmem:[#allocation9 + $0x5b0] sm:$0xff]
    %v1117 = vld [vmem:[#allocation9 + $0x5b8] sm:$0xff]
    %v1118 = vld [vmem:[#allocation9 + $0x5c0] sm:$0xff]
    %v1119 = vld [vmem:[#allocation9 + $0x5c8] sm:$0xff]
    %v1120 = vld [vmem:[#allocation9 + $0x5d0] sm:$0xff]
    %v1121 = vld [vmem:[#allocation9 + $0x5d8] sm:$0xff]
    %v1122 = vld [vmem:[#allocation9 + $0x5e0] sm:$0xff]
    %v1123 = vld [vmem:[#allocation9 + $0x5e8] sm:$0xff]
    %v1124 = vld [vmem:[#allocation9 + $0x5f0] sm:$0xff]
    %v1125 = vld [vmem:[#allocation9 + $0x5f8] sm:$0xff]
    %1126 = vmatprep.subr.mxu0 0.0
    %1127 = vmatpush1.msra.mxu0 %v1094
    %1128 = vmatprep.subr.mxu0 0.0
    %1129 = vmatpush1.msra.mxu0 %v1095
    %1130 = vmatprep.subr.mxu0 0.0
    %1131 = vmatpush1.msra.mxu0 %v1096
    %1132 = vmatprep.subr.mxu0 0.0
    %1133 = vmatpush1.msra.mxu0 %v1097
    %1134 = vmatprep.subr.mxu0 0.0
    %1135 = vmatpush1.msra.mxu0 %v1098
    %1136 = vmatprep.subr.mxu0 0.0
    %1137 = vmatpush1.msra.mxu0 %v1099
    %1138 = vmatprep.subr.mxu0 0.0
    %1139 = vmatpush1.msra.mxu0 %v1100
    %1140 = vmatprep.subr.mxu0 0.0
    %1141 = vmatpush1.msra.mxu0 %v1101
    %1142 = vmatprep.subr.mxu0 0.0
    %1143 = vmatpush1.msra.mxu0 %v1102
    %1144 = vmatprep.subr.mxu0 0.0
    %1145 = vmatpush1.msra.mxu0 %v1103
    %1146 = vmatprep.subr.mxu0 0.0
    %1147 = vmatpush1.msra.mxu0 %v1104
    %1148 = vmatprep.subr.mxu0 0.0
    %1149 = vmatpush1.msra.mxu0 %v1105
    %1150 = vmatprep.subr.mxu0 0.0
    %1151 = vmatpush1.msra.mxu0 %v1106
    %1152 = vmatprep.subr.mxu0 0.0
    %1153 = vmatpush1.msra.mxu0 %v1107
    %1154 = vmatprep.subr.mxu0 0.0
    %1155 = vmatpush1.msra.mxu0 %v1108
    %1156 = vmatprep.subr.mxu0 0.0
    %1157 = vmatpush1.msra.mxu0 %v1109
    %1158 = vmatprep.subr.mxu0 0.0
    %1159 = vmatpush1.msra.mxu0 %v1110
    %1160 = vmatprep.subr.mxu0 0.0
    %1161 = vmatpush1.msra.mxu0 %v1111
    %1162 = vmatprep.subr.mxu0 0.0
    %1163 = vmatpush1.msra.mxu0 %v1112
    %1164 = vmatprep.subr.mxu0 0.0
    %1165 = vmatpush1.msra.mxu0 %v1113
    %1166 = vmatprep.subr.mxu0 0.0
    %1167 = vmatpush1.msra.mxu0 %v1114
    %1168 = vmatprep.subr.mxu0 0.0
    %1169 = vmatpush1.msra.mxu0 %v1115
    %1170 = vmatprep.subr.mxu0 0.0
    %1171 = vmatpush1.msra.mxu0 %v1116
    %1172 = vmatprep.subr.mxu0 0.0
    %1173 = vmatpush1.msra.mxu0 %v1117
    %1174 = vmatprep.subr.mxu0 0.0
    %1175 = vmatpush1.msra.mxu0 %v1118
    %1176 = vmatprep.subr.mxu0 0.0
    %1177 = vmatpush1.msra.mxu0 %v1119
    %1178 = vmatprep.subr.mxu0 0.0
    %1179 = vmatpush1.msra.mxu0 %v1120
    %1180 = vmatprep.subr.mxu0 0.0
    %1181 = vmatpush1.msra.mxu0 %v1121
    %1182 = vmatprep.subr.mxu0 0.0
    %1183 = vmatpush1.msra.mxu0 %v1122
    %1184 = vmatprep.subr.mxu0 0.0
    %1185 = vmatpush1.msra.mxu0 %v1123
    %1186 = vmatprep.subr.mxu0 0.0
    %1187 = vmatpush1.msra.mxu0 %v1124
    %1188 = vmatprep.subr.mxu0 0.0
    %1189 = vmatpush1.msra.mxu0 %v1125
    %1190 = vmatprep.mubr.f32.mxu0 %v560
    %1191 = vmatmul.mubr.f32.gmra.mrb[0].mxu0 %v559
    %v1192 = vpop.f32.mrb[0].mxu0
    %v1193 = vadd.f32 0.0, %v1192
    %v1194 = vpop.f32.mrb[0].mxu0
    %1195 = vdwg.mxu0
    %v1196 = vadd.f32 %v1093, %v1193
    %v1197 = vld [vmem:[#allocation9 + $0x600] sm:$0xff]
    %v1198 = vld [vmem:[#allocation9 + $0x608] sm:$0xff]
    %v1199 = vld [vmem:[#allocation9 + $0x610] sm:$0xff]
    %v1200 = vld [vmem:[#allocation9 + $0x618] sm:$0xff]
    %v1201 = vld [vmem:[#allocation9 + $0x620] sm:$0xff]
    %v1202 = vld [vmem:[#allocation9 + $0x628] sm:$0xff]
    %v1203 = vld [vmem:[#allocation9 + $0x630] sm:$0xff]
    %v1204 = vld [vmem:[#allocation9 + $0x638] sm:$0xff]
    %v1205 = vld [vmem:[#allocation9 + $0x640] sm:$0xff]
    %v1206 = vld [vmem:[#allocation9 + $0x648] sm:$0xff]
    %v1207 = vld [vmem:[#allocation9 + $0x650] sm:$0xff]
    %v1208 = vld [vmem:[#allocation9 + $0x658] sm:$0xff]
    %v1209 = vld [vmem:[#allocation9 + $0x660] sm:$0xff]
    %v1210 = vld [vmem:[#allocation9 + $0x668] sm:$0xff]
    %v1211 = vld [vmem:[#allocation9 + $0x670] sm:$0xff]
    %v1212 = vld [vmem:[#allocation9 + $0x678] sm:$0xff]
    %v1213 = vld [vmem:[#allocation9 + $0x680] sm:$0xff]
    %v1214 = vld [vmem:[#allocation9 + $0x688] sm:$0xff]
    %v1215 = vld [vmem:[#allocation9 + $0x690] sm:$0xff]
    %v1216 = vld [vmem:[#allocation9 + $0x698] sm:$0xff]
    %v1217 = vld [vmem:[#allocation9 + $0x6a0] sm:$0xff]
    %v1218 = vld [vmem:[#allocation9 + $0x6a8] sm:$0xff]
    %v1219 = vld [vmem:[#allocation9 + $0x6b0] sm:$0xff]
    %v1220 = vld [vmem:[#allocation9 + $0x6b8] sm:$0xff]
    %v1221 = vld [vmem:[#allocation9 + $0x6c0] sm:$0xff]
    %v1222 = vld [vmem:[#allocation9 + $0x6c8] sm:$0xff]
    %v1223 = vld [vmem:[#allocation9 + $0x6d0] sm:$0xff]
    %v1224 = vld [vmem:[#allocation9 + $0x6d8] sm:$0xff]
    %v1225 = vld [vmem:[#allocation9 + $0x6e0] sm:$0xff]
    %v1226 = vld [vmem:[#allocation9 + $0x6e8] sm:$0xff]
    %v1227 = vld [vmem:[#allocation9 + $0x6f0] sm:$0xff]
    %v1228 = vld [vmem:[#allocation9 + $0x6f8] sm:$0xff]
    %1229 = vmatprep.subr.mxu0 0.0
    %1230 = vmatpush1.msra.mxu0 %v1197
    %1231 = vmatprep.subr.mxu0 0.0
    %1232 = vmatpush1.msra.mxu0 %v1198
    %1233 = vmatprep.subr.mxu0 0.0
    %1234 = vmatpush1.msra.mxu0 %v1199
    %1235 = vmatprep.subr.mxu0 0.0
    %1236 = vmatpush1.msra.mxu0 %v1200
    %1237 = vmatprep.subr.mxu0 0.0
    %1238 = vmatpush1.msra.mxu0 %v1201
    %1239 = vmatprep.subr.mxu0 0.0
    %1240 = vmatpush1.msra.mxu0 %v1202
    %1241 = vmatprep.subr.mxu0 0.0
    %1242 = vmatpush1.msra.mxu0 %v1203
    %1243 = vmatprep.subr.mxu0 0.0
    %1244 = vmatpush1.msra.mxu0 %v1204
    %1245 = vmatprep.subr.mxu0 0.0
    %1246 = vmatpush1.msra.mxu0 %v1205
    %1247 = vmatprep.subr.mxu0 0.0
    %1248 = vmatpush1.msra.mxu0 %v1206
    %1249 = vmatprep.subr.mxu0 0.0
    %1250 = vmatpush1.msra.mxu0 %v1207
    %1251 = vmatprep.subr.mxu0 0.0
    %1252 = vmatpush1.msra.mxu0 %v1208
    %1253 = vmatprep.subr.mxu0 0.0
    %1254 = vmatpush1.msra.mxu0 %v1209
    %1255 = vmatprep.subr.mxu0 0.0
    %1256 = vmatpush1.msra.mxu0 %v1210
    %1257 = vmatprep.subr.mxu0 0.0
    %1258 = vmatpush1.msra.mxu0 %v1211
    %1259 = vmatprep.subr.mxu0 0.0
    %1260 = vmatpush1.msra.mxu0 %v1212
    %1261 = vmatprep.subr.mxu0 0.0
    %1262 = vmatpush1.msra.mxu0 %v1213
    %1263 = vmatprep.subr.mxu0 0.0
    %1264 = vmatpush1.msra.mxu0 %v1214
    %1265 = vmatprep.subr.mxu0 0.0
    %1266 = vmatpush1.msra.mxu0 %v1215
    %1267 = vmatprep.subr.mxu0 0.0
    %1268 = vmatpush1.msra.mxu0 %v1216
    %1269 = vmatprep.subr.mxu0 0.0
    %1270 = vmatpush1.msra.mxu0 %v1217
    %1271 = vmatprep.subr.mxu0 0.0
    %1272 = vmatpush1.msra.mxu0 %v1218
    %1273 = vmatprep.subr.mxu0 0.0
    %1274 = vmatpush1.msra.mxu0 %v1219
    %1275 = vmatprep.subr.mxu0 0.0
    %1276 = vmatpush1.msra.mxu0 %v1220
    %1277 = vmatprep.subr.mxu0 0.0
    %1278 = vmatpush1.msra.mxu0 %v1221
    %1279 = vmatprep.subr.mxu0 0.0
    %1280 = vmatpush1.msra.mxu0 %v1222
    %1281 = vmatprep.subr.mxu0 0.0
    %1282 = vmatpush1.msra.mxu0 %v1223
    %1283 = vmatprep.subr.mxu0 0.0
    %1284 = vmatpush1.msra.mxu0 %v1224
    %1285 = vmatprep.subr.mxu0 0.0
    %1286 = vmatpush1.msra.mxu0 %v1225
    %1287 = vmatprep.subr.mxu0 0.0
    %1288 = vmatpush1.msra.mxu0 %v1226
    %1289 = vmatprep.subr.mxu0 0.0
    %1290 = vmatpush1.msra.mxu0 %v1227
    %1291 = vmatprep.subr.mxu0 0.0
    %1292 = vmatpush1.msra.mxu0 %v1228
    %1293 = vmatprep.mubr.f32.mxu0 %v562
    %1294 = vmatmul.mubr.f32.gmra.mrb[0].mxu0 %v561
    %v1295 = vpop.f32.mrb[0].mxu0
    %v1296 = vadd.f32 0.0, %v1295
    %v1297 = vpop.f32.mrb[0].mxu0
    %1298 = vdwg.mxu0
    %v1299 = vadd.f32 %v1196, %v1296
    %v1300 = vld [vmem:[#allocation9 + $0x700] sm:$0xff]
    %v1301 = vld [vmem:[#allocation9 + $0x708] sm:$0xff]
    %v1302 = vld [vmem:[#allocation9 + $0x710] sm:$0xff]
    %v1303 = vld [vmem:[#allocation9 + $0x718] sm:$0xff]
    %v1304 = vld [vmem:[#allocation9 + $0x720] sm:$0xff]
    %v1305 = vld [vmem:[#allocation9 + $0x728] sm:$0xff]
    %v1306 = vld [vmem:[#allocation9 + $0x730] sm:$0xff]
    %v1307 = vld [vmem:[#allocation9 + $0x738] sm:$0xff]
    %v1308 = vld [vmem:[#allocation9 + $0x740] sm:$0xff]
    %v1309 = vld [vmem:[#allocation9 + $0x748] sm:$0xff]
    %v1310 = vld [vmem:[#allocation9 + $0x750] sm:$0xff]
    %v1311 = vld [vmem:[#allocation9 + $0x758] sm:$0xff]
    %v1312 = vld [vmem:[#allocation9 + $0x760] sm:$0xff]
    %v1313 = vld [vmem:[#allocation9 + $0x768] sm:$0xff]
    %v1314 = vld [vmem:[#allocation9 + $0x770] sm:$0xff]
    %v1315 = vld [vmem:[#allocation9 + $0x778] sm:$0xff]
    %v1316 = vld [vmem:[#allocation9 + $0x780] sm:$0xff]
    %v1317 = vld [vmem:[#allocation9 + $0x788] sm:$0xff]
    %v1318 = vld [vmem:[#allocation9 + $0x790] sm:$0xff]
    %v1319 = vld [vmem:[#allocation9 + $0x798] sm:$0xff]
    %v1320 = vld [vmem:[#allocation9 + $0x7a0] sm:$0xff]
    %v1321 = vld [vmem:[#allocation9 + $0x7a8] sm:$0xff]
    %v1322 = vld [vmem:[#allocation9 + $0x7b0] sm:$0xff]
    %v1323 = vld [vmem:[#allocation9 + $0x7b8] sm:$0xff]
    %v1324 = vld [vmem:[#allocation9 + $0x7c0] sm:$0xff]
    %v1325 = vld [vmem:[#allocation9 + $0x7c8] sm:$0xff]
    %v1326 = vld [vmem:[#allocation9 + $0x7d0] sm:$0xff]
    %v1327 = vld [vmem:[#allocation9 + $0x7d8] sm:$0xff]
    %v1328 = vld [vmem:[#allocation9 + $0x7e0] sm:$0xff]
    %v1329 = vld [vmem:[#allocation9 + $0x7e8] sm:$0xff]
    %v1330 = vld [vmem:[#allocation9 + $0x7f0] sm:$0xff]
    %v1331 = vld [vmem:[#allocation9 + $0x7f8] sm:$0xff]
    %1332 = vmatprep.subr.mxu0 0.0
    %1333 = vmatpush1.msra.mxu0 %v1300
    %1334 = vmatprep.subr.mxu0 0.0
    %1335 = vmatpush1.msra.mxu0 %v1301
    %1336 = vmatprep.subr.mxu0 0.0
    %1337 = vmatpush1.msra.mxu0 %v1302
    %1338 = vmatprep.subr.mxu0 0.0
    %1339 = vmatpush1.msra.mxu0 %v1303
    %1340 = vmatprep.subr.mxu0 0.0
    %1341 = vmatpush1.msra.mxu0 %v1304
    %1342 = vmatprep.subr.mxu0 0.0
    %1343 = vmatpush1.msra.mxu0 %v1305
    %1344 = vmatprep.subr.mxu0 0.0
    %1345 = vmatpush1.msra.mxu0 %v1306
    %1346 = vmatprep.subr.mxu0 0.0
    %1347 = vmatpush1.msra.mxu0 %v1307
    %1348 = vmatprep.subr.mxu0 0.0
    %1349 = vmatpush1.msra.mxu0 %v1308
    %1350 = vmatprep.subr.mxu0 0.0
    %1351 = vmatpush1.msra.mxu0 %v1309
    %1352 = vmatprep.subr.mxu0 0.0
    %1353 = vmatpush1.msra.mxu0 %v1310
    %1354 = vmatprep.subr.mxu0 0.0
    %1355 = vmatpush1.msra.mxu0 %v1311
    %1356 = vmatprep.subr.mxu0 0.0
    %1357 = vmatpush1.msra.mxu0 %v1312
    %1358 = vmatprep.subr.mxu0 0.0
    %1359 = vmatpush1.msra.mxu0 %v1313
    %1360 = vmatprep.subr.mxu0 0.0
    %1361 = vmatpush1.msra.mxu0 %v1314
    %1362 = vmatprep.subr.mxu0 0.0
    %1363 = vmatpush1.msra.mxu0 %v1315
    %1364 = vmatprep.subr.mxu0 0.0
    %1365 = vmatpush1.msra.mxu0 %v1316
    %1366 = vmatprep.subr.mxu0 0.0
    %1367 = vmatpush1.msra.mxu0 %v1317
    %1368 = vmatprep.subr.mxu0 0.0
    %1369 = vmatpush1.msra.mxu0 %v1318
    %1370 = vmatprep.subr.mxu0 0.0
    %1371 = vmatpush1.msra.mxu0 %v1319
    %1372 = vmatprep.subr.mxu0 0.0
    %1373 = vmatpush1.msra.mxu0 %v1320
    %1374 = vmatprep.subr.mxu0 0.0
    %1375 = vmatpush1.msra.mxu0 %v1321
    %1376 = vmatprep.subr.mxu0 0.0
    %1377 = vmatpush1.msra.mxu0 %v1322
    %1378 = vmatprep.subr.mxu0 0.0
    %1379 = vmatpush1.msra.mxu0 %v1323
    %1380 = vmatprep.subr.mxu0 0.0
    %1381 = vmatpush1.msra.mxu0 %v1324
    %1382 = vmatprep.subr.mxu0 0.0
    %1383 = vmatpush1.msra.mxu0 %v1325
    %1384 = vmatprep.subr.mxu0 0.0
    %1385 = vmatpush1.msra.mxu0 %v1326
    %1386 = vmatprep.subr.mxu0 0.0
    %1387 = vmatpush1.msra.mxu0 %v1327
    %1388 = vmatprep.subr.mxu0 0.0
    %1389 = vmatpush1.msra.mxu0 %v1328
    %1390 = vmatprep.subr.mxu0 0.0
    %1391 = vmatpush1.msra.mxu0 %v1329
    %1392 = vmatprep.subr.mxu0 0.0
    %1393 = vmatpush1.msra.mxu0 %v1330
    %1394 = vmatprep.subr.mxu0 0.0
    %1395 = vmatpush1.msra.mxu0 %v1331
    %1396 = vmatprep.mubr.f32.mxu0 %v564
    %1397 = vmatmul.mubr.f32.gmra.mrb[0].mxu0 %v563
    %v1398 = vpop.f32.mrb[0].mxu0
    %v1399 = vadd.f32 0.0, %v1398
    %v1400 = vpop.f32.mrb[0].mxu0
    %1401 = vdwg.mxu0
    %v1402 = vadd.f32 %v1299, %v1399
    %v1403 = vld [vmem:[#allocation9 + $0x800] sm:$0xff]
    %v1404 = vld [vmem:[#allocation9 + $0x808] sm:$0xff]
    %v1405 = vld [vmem:[#allocation9 + $0x810] sm:$0xff]
    %v1406 = vld [vmem:[#allocation9 + $0x818] sm:$0xff]
    %v1407 = vld [vmem:[#allocation9 + $0x820] sm:$0xff]
    %v1408 = vld [vmem:[#allocation9 + $0x828] sm:$0xff]
    %v1409 = vld [vmem:[#allocation9 + $0x830] sm:$0xff]
    %v1410 = vld [vmem:[#allocation9 + $0x838] sm:$0xff]
    %v1411 = vld [vmem:[#allocation9 + $0x840] sm:$0xff]
    %v1412 = vld [vmem:[#allocation9 + $0x848] sm:$0xff]
    %v1413 = vld [vmem:[#allocation9 + $0x850] sm:$0xff]
    %v1414 = vld [vmem:[#allocation9 + $0x858] sm:$0xff]
    %v1415 = vld [vmem:[#allocation9 + $0x860] sm:$0xff]
    %v1416 = vld [vmem:[#allocation9 + $0x868] sm:$0xff]
    %v1417 = vld [vmem:[#allocation9 + $0x870] sm:$0xff]
    %v1418 = vld [vmem:[#allocation9 + $0x878] sm:$0xff]
    %v1419 = vld [vmem:[#allocation9 + $0x880] sm:$0xff]
    %v1420 = vld [vmem:[#allocation9 + $0x888] sm:$0xff]
    %v1421 = vld [vmem:[#allocation9 + $0x890] sm:$0xff]
    %v1422 = vld [vmem:[#allocation9 + $0x898] sm:$0xff]
    %v1423 = vld [vmem:[#allocation9 + $0x8a0] sm:$0xff]
    %v1424 = vld [vmem:[#allocation9 + $0x8a8] sm:$0xff]
    %v1425 = vld [vmem:[#allocation9 + $0x8b0] sm:$0xff]
    %v1426 = vld [vmem:[#allocation9 + $0x8b8] sm:$0xff]
    %v1427 = vld [vmem:[#allocation9 + $0x8c0] sm:$0xff]
    %v1428 = vld [vmem:[#allocation9 + $0x8c8] sm:$0xff]
    %v1429 = vld [vmem:[#allocation9 + $0x8d0] sm:$0xff]
    %v1430 = vld [vmem:[#allocation9 + $0x8d8] sm:$0xff]
    %v1431 = vld [vmem:[#allocation9 + $0x8e0] sm:$0xff]
    %v1432 = vld [vmem:[#allocation9 + $0x8e8] sm:$0xff]
    %v1433 = vld [vmem:[#allocation9 + $0x8f0] sm:$0xff]
    %v1434 = vld [vmem:[#allocation9 + $0x8f8] sm:$0xff]
    %1435 = vmatprep.subr.mxu0 0.0
    %1436 = vmatpush1.msra.mxu0 %v1403
    %1437 = vmatprep.subr.mxu0 0.0
    %1438 = vmatpush1.msra.mxu0 %v1404
    %1439 = vmatprep.subr.mxu0 0.0
    %1440 = vmatpush1.msra.mxu0 %v1405
    %1441 = vmatprep.subr.mxu0 0.0
    %1442 = vmatpush1.msra.mxu0 %v1406
    %1443 = vmatprep.subr.mxu0 0.0
    %1444 = vmatpush1.msra.mxu0 %v1407
    %1445 = vmatprep.subr.mxu0 0.0
    %1446 = vmatpush1.msra.mxu0 %v1408
    %1447 = vmatprep.subr.mxu0 0.0
    %1448 = vmatpush1.msra.mxu0 %v1409
    %1449 = vmatprep.subr.mxu0 0.0
    %1450 = vmatpush1.msra.mxu0 %v1410
    %1451 = vmatprep.subr.mxu0 0.0
    %1452 = vmatpush1.msra.mxu0 %v1411
    %1453 = vmatprep.subr.mxu0 0.0
    %1454 = vmatpush1.msra.mxu0 %v1412
    %1455 = vmatprep.subr.mxu0 0.0
    %1456 = vmatpush1.msra.mxu0 %v1413
    %1457 = vmatprep.subr.mxu0 0.0
    %1458 = vmatpush1.msra.mxu0 %v1414
    %1459 = vmatprep.subr.mxu0 0.0
    %1460 = vmatpush1.msra.mxu0 %v1415
    %1461 = vmatprep.subr.mxu0 0.0
    %1462 = vmatpush1.msra.mxu0 %v1416
    %1463 = vmatprep.subr.mxu0 0.0
    %1464 = vmatpush1.msra.mxu0 %v1417
    %1465 = vmatprep.subr.mxu0 0.0
    %1466 = vmatpush1.msra.mxu0 %v1418
    %1467 = vmatprep.subr.mxu0 0.0
    %1468 = vmatpush1.msra.mxu0 %v1419
    %1469 = vmatprep.subr.mxu0 0.0
    %1470 = vmatpush1.msra.mxu0 %v1420
    %1471 = vmatprep.subr.mxu0 0.0
    %1472 = vmatpush1.msra.mxu0 %v1421
    %1473 = vmatprep.subr.mxu0 0.0
    %1474 = vmatpush1.msra.mxu0 %v1422
    %1475 = vmatprep.subr.mxu0 0.0
    %1476 = vmatpush1.msra.mxu0 %v1423
    %1477 = vmatprep.subr.mxu0 0.0
    %1478 = vmatpush1.msra.mxu0 %v1424
    %1479 = vmatprep.subr.mxu0 0.0
    %1480 = vmatpush1.msra.mxu0 %v1425
    %1481 = vmatprep.subr.mxu0 0.0
    %1482 = vmatpush1.msra.mxu0 %v1426
    %1483 = vmatprep.subr.mxu0 0.0
    %1484 = vmatpush1.msra.mxu0 %v1427
    %1485 = vmatprep.subr.mxu0 0.0
    %1486 = vmatpush1.msra.mxu0 %v1428
    %1487 = vmatprep.subr.mxu0 0.0
    %1488 = vmatpush1.msra.mxu0 %v1429
    %1489 = vmatprep.subr.mxu0 0.0
    %1490 = vmatpush1.msra.mxu0 %v1430
    %1491 = vmatprep.subr.mxu0 0.0
    %1492 = vmatpush1.msra.mxu0 %v1431
    %1493 = vmatprep.subr.mxu0 0.0
    %1494 = vmatpush1.msra.mxu0 %v1432
    %1495 = vmatprep.subr.mxu0 0.0
    %1496 = vmatpush1.msra.mxu0 %v1433
    %1497 = vmatprep.subr.mxu0 0.0
    %1498 = vmatpush1.msra.mxu0 %v1434
    %1499 = vmatprep.mubr.f32.mxu0 %v566
    %1500 = vmatmul.mubr.f32.gmra.mrb[0].mxu0 %v565
    %v1501 = vpop.f32.mrb[0].mxu0
    %v1502 = vadd.f32 0.0, %v1501
    %v1503 = vpop.f32.mrb[0].mxu0
    %1504 = vdwg.mxu0
    %v1505 = vadd.f32 %v1402, %v1502
    %v1506 = vld [vmem:[#allocation9 + $0x900] sm:$0xff]
    %v1507 = vld [vmem:[#allocation9 + $0x908] sm:$0xff]
    %v1508 = vld [vmem:[#allocation9 + $0x910] sm:$0xff]
    %v1509 = vld [vmem:[#allocation9 + $0x918] sm:$0xff]
    %v1510 = vld [vmem:[#allocation9 + $0x920] sm:$0xff]
    %v1511 = vld [vmem:[#allocation9 + $0x928] sm:$0xff]
    %v1512 = vld [vmem:[#allocation9 + $0x930] sm:$0xff]
    %v1513 = vld [vmem:[#allocation9 + $0x938] sm:$0xff]
    %v1514 = vld [vmem:[#allocation9 + $0x940] sm:$0xff]
    %v1515 = vld [vmem:[#allocation9 + $0x948] sm:$0xff]
    %v1516 = vld [vmem:[#allocation9 + $0x950] sm:$0xff]
    %v1517 = vld [vmem:[#allocation9 + $0x958] sm:$0xff]
    %v1518 = vld [vmem:[#allocation9 + $0x960] sm:$0xff]
    %v1519 = vld [vmem:[#allocation9 + $0x968] sm:$0xff]
    %v1520 = vld [vmem:[#allocation9 + $0x970] sm:$0xff]
    %v1521 = vld [vmem:[#allocation9 + $0x978] sm:$0xff]
    %v1522 = vld [vmem:[#allocation9 + $0x980] sm:$0xff]
    %v1523 = vld [vmem:[#allocation9 + $0x988] sm:$0xff]
    %v1524 = vld [vmem:[#allocation9 + $0x990] sm:$0xff]
    %v1525 = vld [vmem:[#allocation9 + $0x998] sm:$0xff]
    %v1526 = vld [vmem:[#allocation9 + $0x9a0] sm:$0xff]
    %v1527 = vld [vmem:[#allocation9 + $0x9a8] sm:$0xff]
    %v1528 = vld [vmem:[#allocation9 + $0x9b0] sm:$0xff]
    %v1529 = vld [vmem:[#allocation9 + $0x9b8] sm:$0xff]
    %v1530 = vld [vmem:[#allocation9 + $0x9c0] sm:$0xff]
    %v1531 = vld [vmem:[#allocation9 + $0x9c8] sm:$0xff]
    %v1532 = vld [vmem:[#allocation9 + $0x9d0] sm:$0xff]
    %v1533 = vld [vmem:[#allocation9 + $0x9d8] sm:$0xff]
    %v1534 = vld [vmem:[#allocation9 + $0x9e0] sm:$0xff]
    %v1535 = vld [vmem:[#allocation9 + $0x9e8] sm:$0xff]
    %v1536 = vld [vmem:[#allocation9 + $0x9f0] sm:$0xff]
    %v1537 = vld [vmem:[#allocation9 + $0x9f8] sm:$0xff]
    %1538 = vmatprep.subr.mxu0 0.0
    %1539 = vmatpush1.msra.mxu0 %v1506
    %1540 = vmatprep.subr.mxu0 0.0
    %1541 = vmatpush1.msra.mxu0 %v1507
    %1542 = vmatprep.subr.mxu0 0.0
    %1543 = vmatpush1.msra.mxu0 %v1508
    %1544 = vmatprep.subr.mxu0 0.0
    %1545 = vmatpush1.msra.mxu0 %v1509
    %1546 = vmatprep.subr.mxu0 0.0
    %1547 = vmatpush1.msra.mxu0 %v1510
    %1548 = vmatprep.subr.mxu0 0.0
    %1549 = vmatpush1.msra.mxu0 %v1511
    %1550 = vmatprep.subr.mxu0 0.0
    %1551 = vmatpush1.msra.mxu0 %v1512
    %1552 = vmatprep.subr.mxu0 0.0
    %1553 = vmatpush1.msra.mxu0 %v1513
    %1554 = vmatprep.subr.mxu0 0.0
    %1555 = vmatpush1.msra.mxu0 %v1514
    %1556 = vmatprep.subr.mxu0 0.0
    %1557 = vmatpush1.msra.mxu0 %v1515
    %1558 = vmatprep.subr.mxu0 0.0
    %1559 = vmatpush1.msra.mxu0 %v1516
    %1560 = vmatprep.subr.mxu0 0.0
    %1561 = vmatpush1.msra.mxu0 %v1517
    %1562 = vmatprep.subr.mxu0 0.0
    %1563 = vmatpush1.msra.mxu0 %v1518
    %1564 = vmatprep.subr.mxu0 0.0
    %1565 = vmatpush1.msra.mxu0 %v1519
    %1566 = vmatprep.subr.mxu0 0.0
    %1567 = vmatpush1.msra.mxu0 %v1520
    %1568 = vmatprep.subr.mxu0 0.0
    %1569 = vmatpush1.msra.mxu0 %v1521
    %1570 = vmatprep.subr.mxu0 0.0
    %1571 = vmatpush1.msra.mxu0 %v1522
    %1572 = vmatprep.subr.mxu0 0.0
    %1573 = vmatpush1.msra.mxu0 %v1523
    %1574 = vmatprep.subr.mxu0 0.0
    %1575 = vmatpush1.msra.mxu0 %v1524
    %1576 = vmatprep.subr.mxu0 0.0
    %1577 = vmatpush1.msra.mxu0 %v1525
    %1578 = vmatprep.subr.mxu0 0.0
    %1579 = vmatpush1.msra.mxu0 %v1526
    %1580 = vmatprep.subr.mxu0 0.0
    %1581 = vmatpush1.msra.mxu0 %v1527
    %1582 = vmatprep.subr.mxu0 0.0
    %1583 = vmatpush1.msra.mxu0 %v1528
    %1584 = vmatprep.subr.mxu0 0.0
    %1585 = vmatpush1.msra.mxu0 %v1529
    %1586 = vmatprep.subr.mxu0 0.0
    %1587 = vmatpush1.msra.mxu0 %v1530
    %1588 = vmatprep.subr.mxu0 0.0
    %1589 = vmatpush1.msra.mxu0 %v1531
    %1590 = vmatprep.subr.mxu0 0.0
    %1591 = vmatpush1.msra.mxu0 %v1532
    %1592 = vmatprep.subr.mxu0 0.0
    %1593 = vmatpush1.msra.mxu0 %v1533
    %1594 = vmatprep.subr.mxu0 0.0
    %1595 = vmatpush1.msra.mxu0 %v1534
    %1596 = vmatprep.subr.mxu0 0.0
    %1597 = vmatpush1.msra.mxu0 %v1535
    %1598 = vmatprep.subr.mxu0 0.0
    %1599 = vmatpush1.msra.mxu0 %v1536
    %1600 = vmatprep.subr.mxu0 0.0
    %1601 = vmatpush1.msra.mxu0 %v1537
    %1602 = vmatprep.mubr.f32.mxu0 %v568
    %1603 = vmatmul.mubr.f32.gmra.mrb[0].mxu0 %v567
    %v1604 = vpop.f32.mrb[0].mxu0
    %v1605 = vadd.f32 0.0, %v1604
    %v1606 = vpop.f32.mrb[0].mxu0
    %1607 = vdwg.mxu0
    %v1608 = vadd.f32 %v1505, %v1605
    %v1609 = vld [vmem:[#allocation9 + $0xa00] sm:$0xff]
    %v1610 = vld [vmem:[#allocation9 + $0xa08] sm:$0xff]
    %v1611 = vld [vmem:[#allocation9 + $0xa10] sm:$0xff]
    %v1612 = vld [vmem:[#allocation9 + $0xa18] sm:$0xff]
    %v1613 = vld [vmem:[#allocation9 + $0xa20] sm:$0xff]
    %v1614 = vld [vmem:[#allocation9 + $0xa28] sm:$0xff]
    %v1615 = vld [vmem:[#allocation9 + $0xa30] sm:$0xff]
    %v1616 = vld [vmem:[#allocation9 + $0xa38] sm:$0xff]
    %v1617 = vld [vmem:[#allocation9 + $0xa40] sm:$0xff]
    %v1618 = vld [vmem:[#allocation9 + $0xa48] sm:$0xff]
    %v1619 = vld [vmem:[#allocation9 + $0xa50] sm:$0xff]
    %v1620 = vld [vmem:[#allocation9 + $0xa58] sm:$0xff]
    %v1621 = vld [vmem:[#allocation9 + $0xa60] sm:$0xff]
    %v1622 = vld [vmem:[#allocation9 + $0xa68] sm:$0xff]
    %v1623 = vld [vmem:[#allocation9 + $0xa70] sm:$0xff]
    %v1624 = vld [vmem:[#allocation9 + $0xa78] sm:$0xff]
    %v1625 = vld [vmem:[#allocation9 + $0xa80] sm:$0xff]
    %v1626 = vld [vmem:[#allocation9 + $0xa88] sm:$0xff]
    %v1627 = vld [vmem:[#allocation9 + $0xa90] sm:$0xff]
    %v1628 = vld [vmem:[#allocation9 + $0xa98] sm:$0xff]
    %v1629 = vld [vmem:[#allocation9 + $0xaa0] sm:$0xff]
    %v1630 = vld [vmem:[#allocation9 + $0xaa8] sm:$0xff]
    %v1631 = vld [vmem:[#allocation9 + $0xab0] sm:$0xff]
    %v1632 = vld [vmem:[#allocation9 + $0xab8] sm:$0xff]
    %v1633 = vld [vmem:[#allocation9 + $0xac0] sm:$0xff]
    %v1634 = vld [vmem:[#allocation9 + $0xac8] sm:$0xff]
    %v1635 = vld [vmem:[#allocation9 + $0xad0] sm:$0xff]
    %v1636 = vld [vmem:[#allocation9 + $0xad8] sm:$0xff]
    %v1637 = vld [vmem:[#allocation9 + $0xae0] sm:$0xff]
    %v1638 = vld [vmem:[#allocation9 + $0xae8] sm:$0xff]
    %v1639 = vld [vmem:[#allocation9 + $0xaf0] sm:$0xff]
    %v1640 = vld [vmem:[#allocation9 + $0xaf8] sm:$0xff]
    %1641 = vmatprep.subr.mxu0 0.0
    %1642 = vmatpush1.msra.mxu0 %v1609
    %1643 = vmatprep.subr.mxu0 0.0
    %1644 = vmatpush1.msra.mxu0 %v1610
    %1645 = vmatprep.subr.mxu0 0.0
    %1646 = vmatpush1.msra.mxu0 %v1611
    %1647 = vmatprep.subr.mxu0 0.0
    %1648 = vmatpush1.msra.mxu0 %v1612
    %1649 = vmatprep.subr.mxu0 0.0
    %1650 = vmatpush1.msra.mxu0 %v1613
    %1651 = vmatprep.subr.mxu0 0.0
    %1652 = vmatpush1.msra.mxu0 %v1614
    %1653 = vmatprep.subr.mxu0 0.0
    %1654 = vmatpush1.msra.mxu0 %v1615
    %1655 = vmatprep.subr.mxu0 0.0
    %1656 = vmatpush1.msra.mxu0 %v1616
    %1657 = vmatprep.subr.mxu0 0.0
    %1658 = vmatpush1.msra.mxu0 %v1617
    %1659 = vmatprep.subr.mxu0 0.0
    %1660 = vmatpush1.msra.mxu0 %v1618
    %1661 = vmatprep.subr.mxu0 0.0
    %1662 = vmatpush1.msra.mxu0 %v1619
    %1663 = vmatprep.subr.mxu0 0.0
    %1664 = vmatpush1.msra.mxu0 %v1620
    %1665 = vmatprep.subr.mxu0 0.0
    %1666 = vmatpush1.msra.mxu0 %v1621
    %1667 = vmatprep.subr.mxu0 0.0
    %1668 = vmatpush1.msra.mxu0 %v1622
    %1669 = vmatprep.subr.mxu0 0.0
    %1670 = vmatpush1.msra.mxu0 %v1623
    %1671 = vmatprep.subr.mxu0 0.0
    %1672 = vmatpush1.msra.mxu0 %v1624
    %1673 = vmatprep.subr.mxu0 0.0
    %1674 = vmatpush1.msra.mxu0 %v1625
    %1675 = vmatprep.subr.mxu0 0.0
    %1676 = vmatpush1.msra.mxu0 %v1626
    %1677 = vmatprep.subr.mxu0 0.0
    %1678 = vmatpush1.msra.mxu0 %v1627
    %1679 = vmatprep.subr.mxu0 0.0
    %1680 = vmatpush1.msra.mxu0 %v1628
    %1681 = vmatprep.subr.mxu0 0.0
    %1682 = vmatpush1.msra.mxu0 %v1629
    %1683 = vmatprep.subr.mxu0 0.0
    %1684 = vmatpush1.msra.mxu0 %v1630
    %1685 = vmatprep.subr.mxu0 0.0
    %1686 = vmatpush1.msra.mxu0 %v1631
    %1687 = vmatprep.subr.mxu0 0.0
    %1688 = vmatpush1.msra.mxu0 %v1632
    %1689 = vmatprep.subr.mxu0 0.0
    %1690 = vmatpush1.msra.mxu0 %v1633
    %1691 = vmatprep.subr.mxu0 0.0
    %1692 = vmatpush1.msra.mxu0 %v1634
    %1693 = vmatprep.subr.mxu0 0.0
    %1694 = vmatpush1.msra.mxu0 %v1635
    %1695 = vmatprep.subr.mxu0 0.0
    %1696 = vmatpush1.msra.mxu0 %v1636
    %1697 = vmatprep.subr.mxu0 0.0
    %1698 = vmatpush1.msra.mxu0 %v1637
    %1699 = vmatprep.subr.mxu0 0.0
    %1700 = vmatpush1.msra.mxu0 %v1638
    %1701 = vmatprep.subr.mxu0 0.0
    %1702 = vmatpush1.msra.mxu0 %v1639
    %1703 = vmatprep.subr.mxu0 0.0
    %1704 = vmatpush1.msra.mxu0 %v1640
    %1705 = vmatprep.mubr.f32.mxu0 %v570
    %1706 = vmatmul.mubr.f32.gmra.mrb[0].mxu0 %v569
    %v1707 = vpop.f32.mrb[0].mxu0
    %v1708 = vadd.f32 0.0, %v1707
    %v1709 = vpop.f32.mrb[0].mxu0
    %1710 = vdwg.mxu0
    %v1711 = vadd.f32 %v1608, %v1708
    %v1712 = vld [vmem:[#allocation9 + $0xb00] sm:$0xff]
    %v1713 = vld [vmem:[#allocation9 + $0xb08] sm:$0xff]
    %v1714 = vld [vmem:[#allocation9 + $0xb10] sm:$0xff]
    %v1715 = vld [vmem:[#allocation9 + $0xb18] sm:$0xff]
    %v1716 = vld [vmem:[#allocation9 + $0xb20] sm:$0xff]
    %v1717 = vld [vmem:[#allocation9 + $0xb28] sm:$0xff]
    %v1718 = vld [vmem:[#allocation9 + $0xb30] sm:$0xff]
    %v1719 = vld [vmem:[#allocation9 + $0xb38] sm:$0xff]
    %v1720 = vld [vmem:[#allocation9 + $0xb40] sm:$0xff]
    %v1721 = vld [vmem:[#allocation9 + $0xb48] sm:$0xff]
    %v1722 = vld [vmem:[#allocation9 + $0xb50] sm:$0xff]
    %v1723 = vld [vmem:[#allocation9 + $0xb58] sm:$0xff]
    %v1724 = vld [vmem:[#allocation9 + $0xb60] sm:$0xff]
    %v1725 = vld [vmem:[#allocation9 + $0xb68] sm:$0xff]
    %v1726 = vld [vmem:[#allocation9 + $0xb70] sm:$0xff]
    %v1727 = vld [vmem:[#allocation9 + $0xb78] sm:$0xff]
    %v1728 = vld [vmem:[#allocation9 + $0xb80] sm:$0xff]
    %v1729 = vld [vmem:[#allocation9 + $0xb88] sm:$0xff]
    %v1730 = vld [vmem:[#allocation9 + $0xb90] sm:$0xff]
    %v1731 = vld [vmem:[#allocation9 + $0xb98] sm:$0xff]
    %v1732 = vld [vmem:[#allocation9 + $0xba0] sm:$0xff]
    %v1733 = vld [vmem:[#allocation9 + $0xba8] sm:$0xff]
    %v1734 = vld [vmem:[#allocation9 + $0xbb0] sm:$0xff]
    %v1735 = vld [vmem:[#allocation9 + $0xbb8] sm:$0xff]
    %v1736 = vld [vmem:[#allocation9 + $0xbc0] sm:$0xff]
    %v1737 = vld [vmem:[#allocation9 + $0xbc8] sm:$0xff]
    %v1738 = vld [vmem:[#allocation9 + $0xbd0] sm:$0xff]
    %v1739 = vld [vmem:[#allocation9 + $0xbd8] sm:$0xff]
    %v1740 = vld [vmem:[#allocation9 + $0xbe0] sm:$0xff]
    %v1741 = vld [vmem:[#allocation9 + $0xbe8] sm:$0xff]
    %v1742 = vld [vmem:[#allocation9 + $0xbf0] sm:$0xff]
    %v1743 = vld [vmem:[#allocation9 + $0xbf8] sm:$0xff]
    %1744 = vmatprep.subr.mxu0 0.0
    %1745 = vmatpush1.msra.mxu0 %v1712
    %1746 = vmatprep.subr.mxu0 0.0
    %1747 = vmatpush1.msra.mxu0 %v1713
    %1748 = vmatprep.subr.mxu0 0.0
    %1749 = vmatpush1.msra.mxu0 %v1714
    %1750 = vmatprep.subr.mxu0 0.0
    %1751 = vmatpush1.msra.mxu0 %v1715
    %1752 = vmatprep.subr.mxu0 0.0
    %1753 = vmatpush1.msra.mxu0 %v1716
    %1754 = vmatprep.subr.mxu0 0.0
    %1755 = vmatpush1.msra.mxu0 %v1717
    %1756 = vmatprep.subr.mxu0 0.0
    %1757 = vmatpush1.msra.mxu0 %v1718
    %1758 = vmatprep.subr.mxu0 0.0
    %1759 = vmatpush1.msra.mxu0 %v1719
    %1760 = vmatprep.subr.mxu0 0.0
    %1761 = vmatpush1.msra.mxu0 %v1720
    %1762 = vmatprep.subr.mxu0 0.0
    %1763 = vmatpush1.msra.mxu0 %v1721
    %1764 = vmatprep.subr.mxu0 0.0
    %1765 = vmatpush1.msra.mxu0 %v1722
    %1766 = vmatprep.subr.mxu0 0.0
    %1767 = vmatpush1.msra.mxu0 %v1723
    %1768 = vmatprep.subr.mxu0 0.0
    %1769 = vmatpush1.msra.mxu0 %v1724
    %1770 = vmatprep.subr.mxu0 0.0
    %1771 = vmatpush1.msra.mxu0 %v1725
    %1772 = vmatprep.subr.mxu0 0.0
    %1773 = vmatpush1.msra.mxu0 %v1726
    %1774 = vmatprep.subr.mxu0 0.0
    %1775 = vmatpush1.msra.mxu0 %v1727
    %1776 = vmatprep.subr.mxu0 0.0
    %1777 = vmatpush1.msra.mxu0 %v1728
    %1778 = vmatprep.subr.mxu0 0.0
    %1779 = vmatpush1.msra.mxu0 %v1729
    %1780 = vmatprep.subr.mxu0 0.0
    %1781 = vmatpush1.msra.mxu0 %v1730
    %1782 = vmatprep.subr.mxu0 0.0
    %1783 = vmatpush1.msra.mxu0 %v1731
    %1784 = vmatprep.subr.mxu0 0.0
    %1785 = vmatpush1.msra.mxu0 %v1732
    %1786 = vmatprep.subr.mxu0 0.0
    %1787 = vmatpush1.msra.mxu0 %v1733
    %1788 = vmatprep.subr.mxu0 0.0
    %1789 = vmatpush1.msra.mxu0 %v1734
    %1790 = vmatprep.subr.mxu0 0.0
    %1791 = vmatpush1.msra.mxu0 %v1735
    %1792 = vmatprep.subr.mxu0 0.0
    %1793 = vmatpush1.msra.mxu0 %v1736
    %1794 = vmatprep.subr.mxu0 0.0
    %1795 = vmatpush1.msra.mxu0 %v1737
    %1796 = vmatprep.subr.mxu0 0.0
    %1797 = vmatpush1.msra.mxu0 %v1738
    %1798 = vmatprep.subr.mxu0 0.0
    %1799 = vmatpush1.msra.mxu0 %v1739
    %1800 = vmatprep.subr.mxu0 0.0
    %1801 = vmatpush1.msra.mxu0 %v1740
    %1802 = vmatprep.subr.mxu0 0.0
    %1803 = vmatpush1.msra.mxu0 %v1741
    %1804 = vmatprep.subr.mxu0 0.0
    %1805 = vmatpush1.msra.mxu0 %v1742
    %1806 = vmatprep.subr.mxu0 0.0
    %1807 = vmatpush1.msra.mxu0 %v1743
    %1808 = vmatprep.mubr.f32.mxu0 %v572
    %1809 = vmatmul.mubr.f32.gmra.mrb[0].mxu0 %v571
    %v1810 = vpop.f32.mrb[0].mxu0
    %v1811 = vadd.f32 0.0, %v1810
    %v1812 = vpop.f32.mrb[0].mxu0
    %1813 = vdwg.mxu0
    %v1814 = vadd.f32 %v1711, %v1811
    %v1815 = vld [vmem:[#allocation9 + $0xc00] sm:$0xff]
    %v1816 = vld [vmem:[#allocation9 + $0xc08] sm:$0xff]
    %v1817 = vld [vmem:[#allocation9 + $0xc10] sm:$0xff]
    %v1818 = vld [vmem:[#allocation9 + $0xc18] sm:$0xff]
    %v1819 = vld [vmem:[#allocation9 + $0xc20] sm:$0xff]
    %v1820 = vld [vmem:[#allocation9 + $0xc28] sm:$0xff]
    %v1821 = vld [vmem:[#allocation9 + $0xc30] sm:$0xff]
    %v1822 = vld [vmem:[#allocation9 + $0xc38] sm:$0xff]
    %v1823 = vld [vmem:[#allocation9 + $0xc40] sm:$0xff]
    %v1824 = vld [vmem:[#allocation9 + $0xc48] sm:$0xff]
    %v1825 = vld [vmem:[#allocation9 + $0xc50] sm:$0xff]
    %v1826 = vld [vmem:[#allocation9 + $0xc58] sm:$0xff]
    %v1827 = vld [vmem:[#allocation9 + $0xc60] sm:$0xff]
    %v1828 = vld [vmem:[#allocation9 + $0xc68] sm:$0xff]
    %v1829 = vld [vmem:[#allocation9 + $0xc70] sm:$0xff]
    %v1830 = vld [vmem:[#allocation9 + $0xc78] sm:$0xff]
    %v1831 = vld [vmem:[#allocation9 + $0xc80] sm:$0xff]
    %v1832 = vld [vmem:[#allocation9 + $0xc88] sm:$0xff]
    %v1833 = vld [vmem:[#allocation9 + $0xc90] sm:$0xff]
    %v1834 = vld [vmem:[#allocation9 + $0xc98] sm:$0xff]
    %v1835 = vld [vmem:[#allocation9 + $0xca0] sm:$0xff]
    %v1836 = vld [vmem:[#allocation9 + $0xca8] sm:$0xff]
    %v1837 = vld [vmem:[#allocation9 + $0xcb0] sm:$0xff]
    %v1838 = vld [vmem:[#allocation9 + $0xcb8] sm:$0xff]
    %v1839 = vld [vmem:[#allocation9 + $0xcc0] sm:$0xff]
    %v1840 = vld [vmem:[#allocation9 + $0xcc8] sm:$0xff]
    %v1841 = vld [vmem:[#allocation9 + $0xcd0] sm:$0xff]
    %v1842 = vld [vmem:[#allocation9 + $0xcd8] sm:$0xff]
    %v1843 = vld [vmem:[#allocation9 + $0xce0] sm:$0xff]
    %v1844 = vld [vmem:[#allocation9 + $0xce8] sm:$0xff]
    %v1845 = vld [vmem:[#allocation9 + $0xcf0] sm:$0xff]
    %v1846 = vld [vmem:[#allocation9 + $0xcf8] sm:$0xff]
    %1847 = vmatprep.subr.mxu0 0.0
    %1848 = vmatpush1.msra.mxu0 %v1815
    %1849 = vmatprep.subr.mxu0 0.0
    %1850 = vmatpush1.msra.mxu0 %v1816
    %1851 = vmatprep.subr.mxu0 0.0
    %1852 = vmatpush1.msra.mxu0 %v1817
    %1853 = vmatprep.subr.mxu0 0.0
    %1854 = vmatpush1.msra.mxu0 %v1818
    %1855 = vmatprep.subr.mxu0 0.0
    %1856 = vmatpush1.msra.mxu0 %v1819
    %1857 = vmatprep.subr.mxu0 0.0
    %1858 = vmatpush1.msra.mxu0 %v1820
    %1859 = vmatprep.subr.mxu0 0.0
    %1860 = vmatpush1.msra.mxu0 %v1821
    %1861 = vmatprep.subr.mxu0 0.0
    %1862 = vmatpush1.msra.mxu0 %v1822
    %1863 = vmatprep.subr.mxu0 0.0
    %1864 = vmatpush1.msra.mxu0 %v1823
    %1865 = vmatprep.subr.mxu0 0.0
    %1866 = vmatpush1.msra.mxu0 %v1824
    %1867 = vmatprep.subr.mxu0 0.0
    %1868 = vmatpush1.msra.mxu0 %v1825
    %1869 = vmatprep.subr.mxu0 0.0
    %1870 = vmatpush1.msra.mxu0 %v1826
    %1871 = vmatprep.subr.mxu0 0.0
    %1872 = vmatpush1.msra.mxu0 %v1827
    %1873 = vmatprep.subr.mxu0 0.0
    %1874 = vmatpush1.msra.mxu0 %v1828
    %1875 = vmatprep.subr.mxu0 0.0
    %1876 = vmatpush1.msra.mxu0 %v1829
    %1877 = vmatprep.subr.mxu0 0.0
    %1878 = vmatpush1.msra.mxu0 %v1830
    %1879 = vmatprep.subr.mxu0 0.0
    %1880 = vmatpush1.msra.mxu0 %v1831
    %1881 = vmatprep.subr.mxu0 0.0
    %1882 = vmatpush1.msra.mxu0 %v1832
    %1883 = vmatprep.subr.mxu0 0.0
    %1884 = vmatpush1.msra.mxu0 %v1833
    %1885 = vmatprep.subr.mxu0 0.0
    %1886 = vmatpush1.msra.mxu0 %v1834
    %1887 = vmatprep.subr.mxu0 0.0
    %1888 = vmatpush1.msra.mxu0 %v1835
    %1889 = vmatprep.subr.mxu0 0.0
    %1890 = vmatpush1.msra.mxu0 %v1836
    %1891 = vmatprep.subr.mxu0 0.0
    %1892 = vmatpush1.msra.mxu0 %v1837
    %1893 = vmatprep.subr.mxu0 0.0
    %1894 = vmatpush1.msra.mxu0 %v1838
    %1895 = vmatprep.subr.mxu0 0.0
    %1896 = vmatpush1.msra.mxu0 %v1839
    %1897 = vmatprep.subr.mxu0 0.0
    %1898 = vmatpush1.msra.mxu0 %v1840
    %1899 = vmatprep.subr.mxu0 0.0
    %1900 = vmatpush1.msra.mxu0 %v1841
    %1901 = vmatprep.subr.mxu0 0.0
    %1902 = vmatpush1.msra.mxu0 %v1842
    %1903 = vmatprep.subr.mxu0 0.0
    %1904 = vmatpush1.msra.mxu0 %v1843
    %1905 = vmatprep.subr.mxu0 0.0
    %1906 = vmatpush1.msra.mxu0 %v1844
    %1907 = vmatprep.subr.mxu0 0.0
    %1908 = vmatpush1.msra.mxu0 %v1845
    %1909 = vmatprep.subr.mxu0 0.0
    %1910 = vmatpush1.msra.mxu0 %v1846
    %1911 = vmatprep.mubr.f32.mxu0 %v574
    %1912 = vmatmul.mubr.f32.gmra.mrb[0].mxu0 %v573
    %v1913 = vpop.f32.mrb[0].mxu0
    %v1914 = vadd.f32 0.0, %v1913
    %v1915 = vpop.f32.mrb[0].mxu0
    %1916 = vdwg.mxu0
    %v1917 = vadd.f32 %v1814, %v1914
    %v1918 = vld [vmem:[#allocation9 + $0xd00] sm:$0xff]
    %v1919 = vld [vmem:[#allocation9 + $0xd08] sm:$0xff]
    %v1920 = vld [vmem:[#allocation9 + $0xd10] sm:$0xff]
    %v1921 = vld [vmem:[#allocation9 + $0xd18] sm:$0xff]
    %v1922 = vld [vmem:[#allocation9 + $0xd20] sm:$0xff]
    %v1923 = vld [vmem:[#allocation9 + $0xd28] sm:$0xff]
    %v1924 = vld [vmem:[#allocation9 + $0xd30] sm:$0xff]
    %v1925 = vld [vmem:[#allocation9 + $0xd38] sm:$0xff]
    %v1926 = vld [vmem:[#allocation9 + $0xd40] sm:$0xff]
    %v1927 = vld [vmem:[#allocation9 + $0xd48] sm:$0xff]
    %v1928 = vld [vmem:[#allocation9 + $0xd50] sm:$0xff]
    %v1929 = vld [vmem:[#allocation9 + $0xd58] sm:$0xff]
    %v1930 = vld [vmem:[#allocation9 + $0xd60] sm:$0xff]
    %v1931 = vld [vmem:[#allocation9 + $0xd68] sm:$0xff]
    %v1932 = vld [vmem:[#allocation9 + $0xd70] sm:$0xff]
    %v1933 = vld [vmem:[#allocation9 + $0xd78] sm:$0xff]
    %v1934 = vld [vmem:[#allocation9 + $0xd80] sm:$0xff]
    %v1935 = vld [vmem:[#allocation9 + $0xd88] sm:$0xff]
    %v1936 = vld [vmem:[#allocation9 + $0xd90] sm:$0xff]
    %v1937 = vld [vmem:[#allocation9 + $0xd98] sm:$0xff]
    %v1938 = vld [vmem:[#allocation9 + $0xda0] sm:$0xff]
    %v1939 = vld [vmem:[#allocation9 + $0xda8] sm:$0xff]
    %v1940 = vld [vmem:[#allocation9 + $0xdb0] sm:$0xff]
    %v1941 = vld [vmem:[#allocation9 + $0xdb8] sm:$0xff]
    %v1942 = vld [vmem:[#allocation9 + $0xdc0] sm:$0xff]
    %v1943 = vld [vmem:[#allocation9 + $0xdc8] sm:$0xff]
    %v1944 = vld [vmem:[#allocation9 + $0xdd0] sm:$0xff]
    %v1945 = vld [vmem:[#allocation9 + $0xdd8] sm:$0xff]
    %v1946 = vld [vmem:[#allocation9 + $0xde0] sm:$0xff]
    %v1947 = vld [vmem:[#allocation9 + $0xde8] sm:$0xff]
    %v1948 = vld [vmem:[#allocation9 + $0xdf0] sm:$0xff]
    %v1949 = vld [vmem:[#allocation9 + $0xdf8] sm:$0xff]
    %1950 = vmatprep.subr.mxu0 0.0
    %1951 = vmatpush1.msra.mxu0 %v1918
    %1952 = vmatprep.subr.mxu0 0.0
    %1953 = vmatpush1.msra.mxu0 %v1919
    %1954 = vmatprep.subr.mxu0 0.0
    %1955 = vmatpush1.msra.mxu0 %v1920
    %1956 = vmatprep.subr.mxu0 0.0
    %1957 = vmatpush1.msra.mxu0 %v1921
    %1958 = vmatprep.subr.mxu0 0.0
    %1959 = vmatpush1.msra.mxu0 %v1922
    %1960 = vmatprep.subr.mxu0 0.0
    %1961 = vmatpush1.msra.mxu0 %v1923
    %1962 = vmatprep.subr.mxu0 0.0
    %1963 = vmatpush1.msra.mxu0 %v1924
    %1964 = vmatprep.subr.mxu0 0.0
    %1965 = vmatpush1.msra.mxu0 %v1925
    %1966 = vmatprep.subr.mxu0 0.0
    %1967 = vmatpush1.msra.mxu0 %v1926
    %1968 = vmatprep.subr.mxu0 0.0
    %1969 = vmatpush1.msra.mxu0 %v1927
    %1970 = vmatprep.subr.mxu0 0.0
    %1971 = vmatpush1.msra.mxu0 %v1928
    %1972 = vmatprep.subr.mxu0 0.0
    %1973 = vmatpush1.msra.mxu0 %v1929
    %1974 = vmatprep.subr.mxu0 0.0
    %1975 = vmatpush1.msra.mxu0 %v1930
    %1976 = vmatprep.subr.mxu0 0.0
    %1977 = vmatpush1.msra.mxu0 %v1931
    %1978 = vmatprep.subr.mxu0 0.0
    %1979 = vmatpush1.msra.mxu0 %v1932
    %1980 = vmatprep.subr.mxu0 0.0
    %1981 = vmatpush1.msra.mxu0 %v1933
    %1982 = vmatprep.subr.mxu0 0.0
    %1983 = vmatpush1.msra.mxu0 %v1934
    %1984 = vmatprep.subr.mxu0 0.0
    %1985 = vmatpush1.msra.mxu0 %v1935
    %1986 = vmatprep.subr.mxu0 0.0
    %1987 = vmatpush1.msra.mxu0 %v1936
    %1988 = vmatprep.subr.mxu0 0.0
    %1989 = vmatpush1.msra.mxu0 %v1937
    %1990 = vmatprep.subr.mxu0 0.0
    %1991 = vmatpush1.msra.mxu0 %v1938
    %1992 = vmatprep.subr.mxu0 0.0
    %1993 = vmatpush1.msra.mxu0 %v1939
    %1994 = vmatprep.subr.mxu0 0.0
    %1995 = vmatpush1.msra.mxu0 %v1940
    %1996 = vmatprep.subr.mxu0 0.0
    %1997 = vmatpush1.msra.mxu0 %v1941
    %1998 = vmatprep.subr.mxu0 0.0
    %1999 = vmatpush1.msra.mxu0 %v1942
    %2000 = vmatprep.subr.mxu0 0.0
    %2001 = vmatpush1.msra.mxu0 %v1943
    %2002 = vmatprep.subr.mxu0 0.0
    %2003 = vmatpush1.msra.mxu0 %v1944
    %2004 = vmatprep.subr.mxu0 0.0
    %2005 = vmatpush1.msra.mxu0 %v1945
    %2006 = vmatprep.subr.mxu0 0.0
    %2007 = vmatpush1.msra.mxu0 %v1946
    %2008 = vmatprep.subr.mxu0 0.0
    %2009 = vmatpush1.msra.mxu0 %v1947
    %2010 = vmatprep.subr.mxu0 0.0
    %2011 = vmatpush1.msra.mxu0 %v1948
    %2012 = vmatprep.subr.mxu0 0.0
    %2013 = vmatpush1.msra.mxu0 %v1949
    %2014 = vmatprep.mubr.f32.mxu0 %v576
    %2015 = vmatmul.mubr.f32.gmra.mrb[0].mxu0 %v575
    %v2016 = vpop.f32.mrb[0].mxu0
    %v2017 = vadd.f32 0.0, %v2016
    %v2018 = vpop.f32.mrb[0].mxu0
    %2019 = vdwg.mxu0
    %v2020 = vadd.f32 %v1917, %v2017
    %v2021 = vld [vmem:[#allocation9 + $0xe00] sm:$0xff]
    %v2022 = vld [vmem:[#allocation9 + $0xe08] sm:$0xff]
    %v2023 = vld [vmem:[#allocation9 + $0xe10] sm:$0xff]
    %v2024 = vld [vmem:[#allocation9 + $0xe18] sm:$0xff]
    %v2025 = vld [vmem:[#allocation9 + $0xe20] sm:$0xff]
    %v2026 = vld [vmem:[#allocation9 + $0xe28] sm:$0xff]
    %v2027 = vld [vmem:[#allocation9 + $0xe30] sm:$0xff]
    %v2028 = vld [vmem:[#allocation9 + $0xe38] sm:$0xff]
    %v2029 = vld [vmem:[#allocation9 + $0xe40] sm:$0xff]
    %v2030 = vld [vmem:[#allocation9 + $0xe48] sm:$0xff]
    %v2031 = vld [vmem:[#allocation9 + $0xe50] sm:$0xff]
    %v2032 = vld [vmem:[#allocation9 + $0xe58] sm:$0xff]
    %v2033 = vld [vmem:[#allocation9 + $0xe60] sm:$0xff]
    %v2034 = vld [vmem:[#allocation9 + $0xe68] sm:$0xff]
    %v2035 = vld [vmem:[#allocation9 + $0xe70] sm:$0xff]
    %v2036 = vld [vmem:[#allocation9 + $0xe78] sm:$0xff]
    %v2037 = vld [vmem:[#allocation9 + $0xe80] sm:$0xff]
    %v2038 = vld [vmem:[#allocation9 + $0xe88] sm:$0xff]
    %v2039 = vld [vmem:[#allocation9 + $0xe90] sm:$0xff]
    %v2040 = vld [vmem:[#allocation9 + $0xe98] sm:$0xff]
    %v2041 = vld [vmem:[#allocation9 + $0xea0] sm:$0xff]
    %v2042 = vld [vmem:[#allocation9 + $0xea8] sm:$0xff]
    %v2043 = vld [vmem:[#allocation9 + $0xeb0] sm:$0xff]
    %v2044 = vld [vmem:[#allocation9 + $0xeb8] sm:$0xff]
    %v2045 = vld [vmem:[#allocation9 + $0xec0] sm:$0xff]
    %v2046 = vld [vmem:[#allocation9 + $0xec8] sm:$0xff]
    %v2047 = vld [vmem:[#allocation9 + $0xed0] sm:$0xff]
    %v2048 = vld [vmem:[#allocation9 + $0xed8] sm:$0xff]
    %v2049 = vld [vmem:[#allocation9 + $0xee0] sm:$0xff]
    %v2050 = vld [vmem:[#allocation9 + $0xee8] sm:$0xff]
    %v2051 = vld [vmem:[#allocation9 + $0xef0] sm:$0xff]
    %v2052 = vld [vmem:[#allocation9 + $0xef8] sm:$0xff]
    %2053 = vmatprep.subr.mxu0 0.0
    %2054 = vmatpush1.msra.mxu0 %v2021
    %2055 = vmatprep.subr.mxu0 0.0
    %2056 = vmatpush1.msra.mxu0 %v2022
    %2057 = vmatprep.subr.mxu0 0.0
    %2058 = vmatpush1.msra.mxu0 %v2023
    %2059 = vmatprep.subr.mxu0 0.0
    %2060 = vmatpush1.msra.mxu0 %v2024
    %2061 = vmatprep.subr.mxu0 0.0
    %2062 = vmatpush1.msra.mxu0 %v2025
    %2063 = vmatprep.subr.mxu0 0.0
    %2064 = vmatpush1.msra.mxu0 %v2026
    %2065 = vmatprep.subr.mxu0 0.0
    %2066 = vmatpush1.msra.mxu0 %v2027
    %2067 = vmatprep.subr.mxu0 0.0
    %2068 = vmatpush1.msra.mxu0 %v2028
    %2069 = vmatprep.subr.mxu0 0.0
    %2070 = vmatpush1.msra.mxu0 %v2029
    %2071 = vmatprep.subr.mxu0 0.0
    %2072 = vmatpush1.msra.mxu0 %v2030
    %2073 = vmatprep.subr.mxu0 0.0
    %2074 = vmatpush1.msra.mxu0 %v2031
    %2075 = vmatprep.subr.mxu0 0.0
    %2076 = vmatpush1.msra.mxu0 %v2032
    %2077 = vmatprep.subr.mxu0 0.0
    %2078 = vmatpush1.msra.mxu0 %v2033
    %2079 = vmatprep.subr.mxu0 0.0
    %2080 = vmatpush1.msra.mxu0 %v2034
    %2081 = vmatprep.subr.mxu0 0.0
    %2082 = vmatpush1.msra.mxu0 %v2035
    %2083 = vmatprep.subr.mxu0 0.0
    %2084 = vmatpush1.msra.mxu0 %v2036
    %2085 = vmatprep.subr.mxu0 0.0
    %2086 = vmatpush1.msra.mxu0 %v2037
    %2087 = vmatprep.subr.mxu0 0.0
    %2088 = vmatpush1.msra.mxu0 %v2038
    %2089 = vmatprep.subr.mxu0 0.0
    %2090 = vmatpush1.msra.mxu0 %v2039
    %2091 = vmatprep.subr.mxu0 0.0
    %2092 = vmatpush1.msra.mxu0 %v2040
    %2093 = vmatprep.subr.mxu0 0.0
    %2094 = vmatpush1.msra.mxu0 %v2041
    %2095 = vmatprep.subr.mxu0 0.0
    %2096 = vmatpush1.msra.mxu0 %v2042
    %2097 = vmatprep.subr.mxu0 0.0
    %2098 = vmatpush1.msra.mxu0 %v2043
    %2099 = vmatprep.subr.mxu0 0.0
    %2100 = vmatpush1.msra.mxu0 %v2044
    %2101 = vmatprep.subr.mxu0 0.0
    %2102 = vmatpush1.msra.mxu0 %v2045
    %2103 = vmatprep.subr.mxu0 0.0
    %2104 = vmatpush1.msra.mxu0 %v2046
    %2105 = vmatprep.subr.mxu0 0.0
    %2106 = vmatpush1.msra.mxu0 %v2047
    %2107 = vmatprep.subr.mxu0 0.0
    %2108 = vmatpush1.msra.mxu0 %v2048
    %2109 = vmatprep.subr.mxu0 0.0
    %2110 = vmatpush1.msra.mxu0 %v2049
    %2111 = vmatprep.subr.mxu0 0.0
    %2112 = vmatpush1.msra.mxu0 %v2050
    %2113 = vmatprep.subr.mxu0 0.0
    %2114 = vmatpush1.msra.mxu0 %v2051
    %2115 = vmatprep.subr.mxu0 0.0
    %2116 = vmatpush1.msra.mxu0 %v2052
    %2117 = vmatprep.mubr.f32.mxu0 %v578
    %2118 = vmatmul.mubr.f32.gmra.mrb[0].mxu0 %v577
    %v2119 = vpop.f32.mrb[0].mxu0
    %v2120 = vadd.f32 0.0, %v2119
    %v2121 = vpop.f32.mrb[0].mxu0
    %2122 = vdwg.mxu0
    %v2123 = vadd.f32 %v2020, %v2120
    %v2124 = vld [vmem:[#allocation9 + $0xf00] sm:$0xff]
    %v2125 = vld [vmem:[#allocation9 + $0xf08] sm:$0xff]
    %v2126 = vld [vmem:[#allocation9 + $0xf10] sm:$0xff]
    %v2127 = vld [vmem:[#allocation9 + $0xf18] sm:$0xff]
    %v2128 = vld [vmem:[#allocation9 + $0xf20] sm:$0xff]
    %v2129 = vld [vmem:[#allocation9 + $0xf28] sm:$0xff]
    %v2130 = vld [vmem:[#allocation9 + $0xf30] sm:$0xff]
    %v2131 = vld [vmem:[#allocation9 + $0xf38] sm:$0xff]
    %v2132 = vld [vmem:[#allocation9 + $0xf40] sm:$0xff]
    %v2133 = vld [vmem:[#allocation9 + $0xf48] sm:$0xff]
    %v2134 = vld [vmem:[#allocation9 + $0xf50] sm:$0xff]
    %v2135 = vld [vmem:[#allocation9 + $0xf58] sm:$0xff]
    %v2136 = vld [vmem:[#allocation9 + $0xf60] sm:$0xff]
    %v2137 = vld [vmem:[#allocation9 + $0xf68] sm:$0xff]
    %v2138 = vld [vmem:[#allocation9 + $0xf70] sm:$0xff]
    %v2139 = vld [vmem:[#allocation9 + $0xf78] sm:$0xff]
    %v2140 = vld [vmem:[#allocation9 + $0xf80] sm:$0xff]
    %v2141 = vld [vmem:[#allocation9 + $0xf88] sm:$0xff]
    %v2142 = vld [vmem:[#allocation9 + $0xf90] sm:$0xff]
    %v2143 = vld [vmem:[#allocation9 + $0xf98] sm:$0xff]
    %v2144 = vld [vmem:[#allocation9 + $0xfa0] sm:$0xff]
    %v2145 = vld [vmem:[#allocation9 + $0xfa8] sm:$0xff]
    %v2146 = vld [vmem:[#allocation9 + $0xfb0] sm:$0xff]
    %v2147 = vld [vmem:[#allocation9 + $0xfb8] sm:$0xff]
    %v2148 = vld [vmem:[#allocation9 + $0xfc0] sm:$0xff]
    %v2149 = vld [vmem:[#allocation9 + $0xfc8] sm:$0xff]
    %v2150 = vld [vmem:[#allocation9 + $0xfd0] sm:$0xff]
    %v2151 = vld [vmem:[#allocation9 + $0xfd8] sm:$0xff]
    %v2152 = vld [vmem:[#allocation9 + $0xfe0] sm:$0xff]
    %v2153 = vld [vmem:[#allocation9 + $0xfe8] sm:$0xff]
    %v2154 = vld [vmem:[#allocation9 + $0xff0] sm:$0xff]
    %v2155 = vld [vmem:[#allocation9 + $0xff8] sm:$0xff]
    %2156 = vmatprep.subr.mxu0 0.0
    %2157 = vmatpush1.msra.mxu0 %v2124
    %2158 = vmatprep.subr.mxu0 0.0
    %2159 = vmatpush1.msra.mxu0 %v2125
    %2160 = vmatprep.subr.mxu0 0.0
    %2161 = vmatpush1.msra.mxu0 %v2126
    %2162 = vmatprep.subr.mxu0 0.0
    %2163 = vmatpush1.msra.mxu0 %v2127
    %2164 = vmatprep.subr.mxu0 0.0
    %2165 = vmatpush1.msra.mxu0 %v2128
    %2166 = vmatprep.subr.mxu0 0.0
    %2167 = vmatpush1.msra.mxu0 %v2129
    %2168 = vmatprep.subr.mxu0 0.0
    %2169 = vmatpush1.msra.mxu0 %v2130
    %2170 = vmatprep.subr.mxu0 0.0
    %2171 = vmatpush1.msra.mxu0 %v2131
    %2172 = vmatprep.subr.mxu0 0.0
    %2173 = vmatpush1.msra.mxu0 %v2132
    %2174 = vmatprep.subr.mxu0 0.0
    %2175 = vmatpush1.msra.mxu0 %v2133
    %2176 = vmatprep.subr.mxu0 0.0
    %2177 = vmatpush1.msra.mxu0 %v2134
    %2178 = vmatprep.subr.mxu0 0.0
    %2179 = vmatpush1.msra.mxu0 %v2135
    %2180 = vmatprep.subr.mxu0 0.0
    %2181 = vmatpush1.msra.mxu0 %v2136
    %2182 = vmatprep.subr.mxu0 0.0
    %2183 = vmatpush1.msra.mxu0 %v2137
    %2184 = vmatprep.subr.mxu0 0.0
    %2185 = vmatpush1.msra.mxu0 %v2138
    %2186 = vmatprep.subr.mxu0 0.0
    %2187 = vmatpush1.msra.mxu0 %v2139
    %2188 = vmatprep.subr.mxu0 0.0
    %2189 = vmatpush1.msra.mxu0 %v2140
    %2190 = vmatprep.subr.mxu0 0.0
    %2191 = vmatpush1.msra.mxu0 %v2141
    %2192 = vmatprep.subr.mxu0 0.0
    %2193 = vmatpush1.msra.mxu0 %v2142
    %2194 = vmatprep.subr.mxu0 0.0
    %2195 = vmatpush1.msra.mxu0 %v2143
    %2196 = vmatprep.subr.mxu0 0.0
    %2197 = vmatpush1.msra.mxu0 %v2144
    %2198 = vmatprep.subr.mxu0 0.0
    %2199 = vmatpush1.msra.mxu0 %v2145
    %2200 = vmatprep.subr.mxu0 0.0
    %2201 = vmatpush1.msra.mxu0 %v2146
    %2202 = vmatprep.subr.mxu0 0.0
    %2203 = vmatpush1.msra.mxu0 %v2147
    %2204 = vmatprep.subr.mxu0 0.0
    %2205 = vmatpush1.msra.mxu0 %v2148
    %2206 = vmatprep.subr.mxu0 0.0
    %2207 = vmatpush1.msra.mxu0 %v2149
    %2208 = vmatprep.subr.mxu0 0.0
    %2209 = vmatpush1.msra.mxu0 %v2150
    %2210 = vmatprep.subr.mxu0 0.0
    %2211 = vmatpush1.msra.mxu0 %v2151
    %2212 = vmatprep.subr.mxu0 0.0
    %2213 = vmatpush1.msra.mxu0 %v2152
    %2214 = vmatprep.subr.mxu0 0.0
    %2215 = vmatpush1.msra.mxu0 %v2153
    %2216 = vmatprep.subr.mxu0 0.0
    %2217 = vmatpush1.msra.mxu0 %v2154
    %2218 = vmatprep.subr.mxu0 0.0
    %2219 = vmatpush1.msra.mxu0 %v2155
    %2220 = vmatprep.mubr.f32.mxu0 %v580
    %2221 = vmatmul.mubr.f32.gmra.mrb[0].mxu0 %v579
    %v2222 = vpop.f32.mrb[0].mxu0
    %v2223 = vadd.f32 0.0, %v2222
    %v2224 = vpop.f32.mrb[0].mxu0
    %2225 = vdwg.mxu0
    %v2226 = vadd.f32 %v2123, %v2223
    %v2227 = vld [vmem:[#allocation11] sm:$0x1]
    %v2229 = vlaneseq
    %v2230 = vshrl.u32 %v2229, 7
    %v2231 = vsub.s32 0, %v2230
    %v2232 = vrot.slane %v2227, %v2231
    %v2234 = vadd.f32 %v2226, %v2232
    %2235 = vst [vmem:[#allocation12] sm:$0xff] %v2234
    // Predicated region
    $region42: #{tpu_custom_call.1} parent=1 // pred_check
      _
    $region43: #{tpu_custom_call.1} parent=1 // pred_check_branch
      %2237 = sbr.rel (0) target = $region45
    $region44: #{tpu_custom_call.1} parent=1 // pred_region
      %s2239 = ssub.s32 128, 128
      %2240 = vsyncadd [#allocation5], %s2239
      %s2242 = sshll.u32 [#allocation12], 4
      %s2243 = int_to_ptr.vmem [resolvable:$true] %s2242
      %2245 = dma.vmem_to_hbm [thread:$0]  %s2243, 128, %s5, [#allocation5]
    $region45: #{tpu_custom_call.1} parent=1 // pred_fallthru
      _
    // Predicated region
    $region46: #{tpu_custom_call.1} parent=1 // pred_check
      _
    $region47: #{tpu_custom_call.1} parent=1 // pred_check_branch
      %2247 = sbr.rel (0) target = $region49
    $region48: #{tpu_custom_call.1} parent=1 // pred_region
      %2248 = dma.done [#allocation5], 128
    $region49: #{tpu_custom_call.1} parent=1 // pred_fallthru
      _
    %2249 = vsyncpa [#allocation4], 1
    %2250 = vsyncpa [#allocation7], 1
    %2251 = vsyncpa [#allocation10], 1
    %2252 = vsyncpa [#allocation5], 1

</llo_original>
